<compile_context>
chip_gen: v7x
topology: tpu7x:2x2x1
jax: 0.10.0
libtpu: 0.0.40
codegen_flags: <defaults>
</compile_context>

<pallas_src>
import functools

import jax
import jax.numpy as jnp
from jax.experimental import pallas as pl
from jax.experimental.pallas import tpu as pltpu


# Hidden-layer widths, matching Net.__init__
_ARCH_6_DIMS = (50, 70, 200, 350, 600)          # type_archi == 6  -> 6 Linear layers
_ARCH_7_DIMS = (50, 70, 100, 200, 350, 600)     # otherwise        -> 7 Linear layers

_LANE = 128      # last-dim alignment
_SUBLANE = 8     # second-to-last-dim alignment


def _round_up(x: int, m: int) -> int:
    return ((x + m - 1) // m) * m


def _make_mlp_kernel(num_layers: int):
    """relu(...relu(x@W1+b1)...) @ Wn + bn on one batch tile; weights resident.

    refs = (x, W1..Wn, b_packed, out).  x and Wi are bf16, bias/out are f32.
    """

    def kernel(*refs):
        x_ref = refs[0]
        w_refs = refs[1:1 + num_layers]
        b_ref = refs[1 + num_layers]
        o_ref = refs[2 + num_layers]

        h = x_ref[...]                      # bf16 activations
        off = 0
        for i in range(num_layers):
            pout = w_refs[i].shape[1]
            # bf16 x bf16 -> f32 accumulate on the MXU.
            acc = jnp.dot(h, w_refs[i][...],
                          preferred_element_type=jnp.float32)
            acc = acc + b_ref[:, off:off + pout]     # f32 bias add
            off += pout
            if i < num_layers - 1:
                # ReLU in f32 on the accumulator, then bf16 for the next dot.
                h = jnp.maximum(acc, 0.0).astype(jnp.bfloat16)
            else:
                o_ref[...] = acc.astype(o_ref.dtype)

    return kernel


def init_params(key, input_size: int, output_size: int, type_archi: int):
    """PyTorch-Linear-style init U(-1/sqrt(fan_in), 1/sqrt(fan_in)),
    zero-padded to lane-aligned shapes.  Weights bf16 (one array per layer),
    biases packed into a single (1, sum_pout) f32 buffer."""
    hidden = _ARCH_6_DIMS if type_archi == 6 else _ARCH_7_DIMS
    dims = (input_size,) + hidden + (output_size,)
    pdims = tuple(_round_up(d, _LANE) for d in dims)

    weights = []
    bias_cols = []
    for i in range(len(dims) - 1):
        fan_in, fan_out = dims[i], dims[i + 1]
        pin, pout = pdims[i], pdims[i + 1]
        key, kw, kb = jax.random.split(key, 3)
        bound = 1.0 / (fan_in ** 0.5)
        w = jax.random.uniform(kw, (fan_in, fan_out), jnp.float32, -bound, bound)
        b = jax.random.uniform(kb, (fan_out,), jnp.float32, -bound, bound)
        w_pad = jnp.zeros((pin, pout), jnp.bfloat16)
        w_pad = w_pad.at[:fan_in, :fan_out].set(w.astype(jnp.bfloat16))
        b_pad = jnp.zeros((1, pout), jnp.float32)
        b_pad = b_pad.at[:, :fan_out].set(b[None, :])
        weights.append(w_pad)
        bias_cols.append(b_pad)

    bias_packed = jnp.concatenate(bias_cols, axis=1)   # (1, sum_pout), f32
    return weights, bias_packed


@functools.partial(jax.jit, static_argnames=("num_layers", "tb"))
def _mlp_pallas(x_pad, weights, bias_packed, num_layers, tb):
    pb, in_pad = x_pad.shape
    out_pad = weights[-1].shape[1]
    grid = (pb // tb,)

    # Weights / packed bias: full-array blocks with a grid-invariant index map
    # -> DMA'd once, stay resident in VMEM across all batch tiles.
    w_specs = [pl.BlockSpec(w.shape, lambda i: (0, 0)) for w in weights]
    b_spec = pl.BlockSpec(bias_packed.shape, lambda i: (0, 0))

    flops = 2 * pb * sum(int(w.shape[0]) * int(w.shape[1]) for w in weights)
    bytes_accessed = (int(x_pad.size) * 2                       # bf16 input
                      + sum(int(w.size) * 2 for w in weights)   # bf16 weights
                      + int(bias_packed.size) * 4               # f32 biases
                      + pb * out_pad * 4)                       # f32 output

    return pl.pallas_call(
        _make_mlp_kernel(num_layers),
        grid=grid,
        out_shape=jax.ShapeDtypeStruct((pb, out_pad), jnp.float32),
        in_specs=[pl.BlockSpec((tb, in_pad), lambda i: (i, 0))]
                 + w_specs + [b_spec],
        out_specs=pl.BlockSpec((tb, out_pad), lambda i: (i, 0)),
        compiler_params=pltpu.CompilerParams(
            dimension_semantics=("parallel",)),   # shards batch tiles across TCs on v7x
        cost_estimate=pl.CostEstimate(
            flops=flops, transcendentals=0, bytes_accessed=bytes_accessed),
    )(x_pad, *weights, bias_packed)


def _choose_tiling(b: int):
    """Pick (tb, pb) so that pb % tb == 0 and step overhead is amortized."""
    if b < 256:
        # Small-batch / latency path: one sublane-aligned tile.
        tb = _round_up(max(b, 1), _SUBLANE)
        return tb, tb
    if b <= 2048:
        # Exactly 2 lane-aligned tiles: big tiles + both TensorCores on v7x.
        tb = _round_up(-(-b // 2), _LANE)
        return tb, 2 * tb
    # Large batch: 512-row tiles (>=5 steps; VMEM footprint stays tiny).
    tb = 512
    return tb, _round_up(b, tb)


def net_forward(x, weights, bias_packed, output_size):
    """Forward pass of Net. x: (B, input_size) f32. Returns (B, output_size) f32."""
    num_layers = len(weights)
    b, f = x.shape
    in_pad = weights[0].shape[0]

    tb, pb = _choose_tiling(b)

    # Pad batch & features and store the input in bf16 (dot consumes bf16).
    x_pad = jnp.zeros((pb, in_pad), jnp.bfloat16).at[:b, :f].set(
        x.astype(jnp.bfloat16))
    out = _mlp_pallas(x_pad, tuple(weights), bias_packed, num_layers, tb)
    return out[:b, :output_size]


def _reference_forward(x_pad, weights, bias_packed):
    """Pure-JAX reference with identical rounding (bf16 dot inputs, f32 acc,
    f32 bias add / ReLU)."""
    h = x_pad.astype(jnp.float32)
    off = 0
    for i, w in enumerate(weights):
        pout = w.shape[1]
        b = bias_packed[:, off:off + pout]
        off += pout
        h = jnp.dot(h.astype(jnp.bfloat16).astype(jnp.float32),
                    w.astype(jnp.float32),
                    precision=jax.lax.Precision.HIGHEST) + b
        if i < len(weights) - 1:
            h = jnp.maximum(h, 0.0)
    return h


if __name__ == "__main__":
    key = jax.random.PRNGKey(0)
    input_size, output_size = 16, 8

    kx_small, kx_big, kp6, kp7 = jax.random.split(key, 4)
    x_small = jax.random.normal(kx_small, (2, input_size), jnp.float32)
    x_big = jax.random.normal(kx_big, (256, input_size), jnp.float32)

    ok = True
    for type_archi, kp in ((6, kp6), (7, kp7)):
        weights, bias_packed = init_params(kp, input_size, output_size, type_archi)
        for x in (x_small, x_big):
            out = net_forward(x, weights, bias_packed, output_size)
            out = jax.block_until_ready(out)

            b, f = x.shape
            in_pad = weights[0].shape[0]
            x_pad = jnp.zeros((b, in_pad), jnp.float32).at[:, :f].set(
                x.astype(jnp.bfloat16).astype(jnp.float32))
            ref = _reference_forward(x_pad, weights, bias_packed)[:, :output_size]

            if out.shape != (b, output_size):
                ok = False
            if not jnp.allclose(out, ref, atol=2e-3, rtol=2e-3):
                ok = False

    if ok:
        print("KERNEL_OK")
</pallas_src>

<mosaic_0001>
module attributes {stable_mosaic.version = 11 : i64} {
  func.func @kernel(%arg0: i32, %arg1: memref<8x128xbf16, #tpu.memory_space<vmem>>, %arg2: memref<128x128xbf16, #tpu.memory_space<vmem>>, %arg3: memref<128x128xbf16, #tpu.memory_space<vmem>>, %arg4: memref<128x256xbf16, #tpu.memory_space<vmem>>, %arg5: memref<256x384xbf16, #tpu.memory_space<vmem>>, %arg6: memref<384x640xbf16, #tpu.memory_space<vmem>>, %arg7: memref<640x128xbf16, #tpu.memory_space<vmem>>, %arg8: memref<1x1664xf32, #tpu.memory_space<vmem>>, %arg9: memref<8x128xf32, #tpu.memory_space<vmem>>) attributes {dimension_semantics = [#tpu.dimension_semantics<parallel>], iteration_bounds = array<i64: 1>, scalar_prefetch = 0 : i64, scratch_operands = 0 : i64, tpu.core_type = #tpu.core_type<tc>, window_params = [{transform_indices = @transform_0, window_bounds = array<i64: 8, 128>}, {pipeline_mode = #tpu.pipeline_mode<synchronous>, transform_indices = @transform_1, window_bounds = array<i64: 128, 128>}, {pipeline_mode = #tpu.pipeline_mode<synchronous>, transform_indices = @transform_2, window_bounds = array<i64: 128, 128>}, {pipeline_mode = #tpu.pipeline_mode<synchronous>, transform_indices = @transform_3, window_bounds = array<i64: 128, 256>}, {pipeline_mode = #tpu.pipeline_mode<synchronous>, transform_indices = @transform_4, window_bounds = array<i64: 256, 384>}, {pipeline_mode = #tpu.pipeline_mode<synchronous>, transform_indices = @transform_5, window_bounds = array<i64: 384, 640>}, {pipeline_mode = #tpu.pipeline_mode<synchronous>, transform_indices = @transform_6, window_bounds = array<i64: 640, 128>}, {pipeline_mode = #tpu.pipeline_mode<synchronous>, transform_indices = @transform_7, window_bounds = array<i64: 1, 1664>}, {transform_indices = @transform_8, window_bounds = array<i64: 8, 128>}]} {
    %c0 = arith.constant 0 : index
    %c0_0 = arith.constant 0 : index
    %0 = vector.load %arg1[%c0, %c0_0] : memref<8x128xbf16, #tpu.memory_space<vmem>>, vector<8x128xbf16>
    %c0_1 = arith.constant 0 : index
    %c0_2 = arith.constant 0 : index
    %1 = vector.load %arg2[%c0_1, %c0_2] : memref<128x128xbf16, #tpu.memory_space<vmem>>, vector<128x128xbf16>
    %cst = arith.constant dense<0.000000e+00> : vector<8x128xf32>
    %2 = tpu.matmul %0, %1, %cst {dimension_numbers = #tpu.dot_dimension_numbers<[1], [0], [0], [1], [0, 0, 1, 1], [], []>} : vector<8x128xbf16>, vector<128x128xbf16>, vector<8x128xf32> -> vector<8x128xf32>
    %c0_3 = arith.constant 0 : index
    %c0_4 = arith.constant 0 : index
    %3 = vector.load %arg8[%c0_3, %c0_4] : memref<1x1664xf32, #tpu.memory_space<vmem>>, vector<1x128xf32>
    %4 = vector.broadcast %3 : vector<1x128xf32> to vector<8x128xf32>
    %5 = arith.addf %2, %4 : vector<8x128xf32>
    %cst_5 = arith.constant 0.000000e+00 : f32
    %6 = vector.broadcast %cst_5 : f32 to vector<8x128xf32>
    %7 = arith.maximumf %5, %6 : vector<8x128xf32>
    %8 = arith.truncf %7 : vector<8x128xf32> to vector<8x128xbf16>
    %c0_6 = arith.constant 0 : index
    %c0_7 = arith.constant 0 : index
    %9 = vector.load %arg3[%c0_6, %c0_7] : memref<128x128xbf16, #tpu.memory_space<vmem>>, vector<128x128xbf16>
    %cst_8 = arith.constant dense<0.000000e+00> : vector<8x128xf32>
    %10 = tpu.matmul %8, %9, %cst_8 {dimension_numbers = #tpu.dot_dimension_numbers<[1], [0], [0], [1], [0, 0, 1, 1], [], []>} : vector<8x128xbf16>, vector<128x128xbf16>, vector<8x128xf32> -> vector<8x128xf32>
    %c0_9 = arith.constant 0 : index
    %c128 = arith.constant 128 : index
    %11 = vector.load %arg8[%c0_9, %c128] : memref<1x1664xf32, #tpu.memory_space<vmem>>, vector<1x128xf32>
    %12 = vector.broadcast %11 : vector<1x128xf32> to vector<8x128xf32>
    %13 = arith.addf %10, %12 : vector<8x128xf32>
    %cst_10 = arith.constant 0.000000e+00 : f32
    %14 = vector.broadcast %cst_10 : f32 to vector<8x128xf32>
    %15 = arith.maximumf %13, %14 : vector<8x128xf32>
    %16 = arith.truncf %15 : vector<8x128xf32> to vector<8x128xbf16>
    %c0_11 = arith.constant 0 : index
    %c0_12 = arith.constant 0 : index
    %17 = vector.load %arg4[%c0_11, %c0_12] : memref<128x256xbf16, #tpu.memory_space<vmem>>, vector<128x256xbf16>
    %cst_13 = arith.constant dense<0.000000e+00> : vector<8x256xf32>
    %18 = tpu.matmul %16, %17, %cst_13 {dimension_numbers = #tpu.dot_dimension_numbers<[1], [0], [0], [1], [0, 0, 1, 1], [], []>} : vector<8x128xbf16>, vector<128x256xbf16>, vector<8x256xf32> -> vector<8x256xf32>
    %c0_14 = arith.constant 0 : index
    %c256 = arith.constant 256 : index
    %19 = vector.load %arg8[%c0_14, %c256] : memref<1x1664xf32, #tpu.memory_space<vmem>>, vector<1x256xf32>
    %20 = vector.broadcast %19 : vector<1x256xf32> to vector<8x256xf32>
    %21 = arith.addf %18, %20 : vector<8x256xf32>
    %cst_15 = arith.constant 0.000000e+00 : f32
    %22 = vector.broadcast %cst_15 : f32 to vector<8x256xf32>
    %23 = arith.maximumf %21, %22 : vector<8x256xf32>
    %24 = arith.truncf %23 : vector<8x256xf32> to vector<8x256xbf16>
    %c0_16 = arith.constant 0 : index
    %c0_17 = arith.constant 0 : index
    %25 = vector.load %arg5[%c0_16, %c0_17] : memref<256x384xbf16, #tpu.memory_space<vmem>>, vector<256x384xbf16>
    %cst_18 = arith.constant dense<0.000000e+00> : vector<8x384xf32>
    %26 = tpu.matmul %24, %25, %cst_18 {dimension_numbers = #tpu.dot_dimension_numbers<[1], [0], [0], [1], [0, 0, 1, 1], [], []>} : vector<8x256xbf16>, vector<256x384xbf16>, vector<8x384xf32> -> vector<8x384xf32>
    %c0_19 = arith.constant 0 : index
    %c512 = arith.constant 512 : index
    %27 = vector.load %arg8[%c0_19, %c512] : memref<1x1664xf32, #tpu.memory_space<vmem>>, vector<1x384xf32>
    %28 = vector.broadcast %27 : vector<1x384xf32> to vector<8x384xf32>
    %29 = arith.addf %26, %28 : vector<8x384xf32>
    %cst_20 = arith.constant 0.000000e+00 : f32
    %30 = vector.broadcast %cst_20 : f32 to vector<8x384xf32>
    %31 = arith.maximumf %29, %30 : vector<8x384xf32>
    %32 = arith.truncf %31 : vector<8x384xf32> to vector<8x384xbf16>
    %c0_21 = arith.constant 0 : index
    %c0_22 = arith.constant 0 : index
    %33 = vector.load %arg6[%c0_21, %c0_22] : memref<384x640xbf16, #tpu.memory_space<vmem>>, vector<384x640xbf16>
    %cst_23 = arith.constant dense<0.000000e+00> : vector<8x640xf32>
    %34 = tpu.matmul %32, %33, %cst_23 {dimension_numbers = #tpu.dot_dimension_numbers<[1], [0], [0], [1], [0, 0, 1, 1], [], []>} : vector<8x384xbf16>, vector<384x640xbf16>, vector<8x640xf32> -> vector<8x640xf32>
    %c0_24 = arith.constant 0 : index
    %c896 = arith.constant 896 : index
    %35 = vector.load %arg8[%c0_24, %c896] : memref<1x1664xf32, #tpu.memory_space<vmem>>, vector<1x640xf32>
    %36 = vector.broadcast %35 : vector<1x640xf32> to vector<8x640xf32>
    %37 = arith.addf %34, %36 : vector<8x640xf32>
    %cst_25 = arith.constant 0.000000e+00 : f32
    %38 = vector.broadcast %cst_25 : f32 to vector<8x640xf32>
    %39 = arith.maximumf %37, %38 : vector<8x640xf32>
    %40 = arith.truncf %39 : vector<8x640xf32> to vector<8x640xbf16>
    %c0_26 = arith.constant 0 : index
    %c0_27 = arith.constant 0 : index
    %41 = vector.load %arg7[%c0_26, %c0_27] : memref<640x128xbf16, #tpu.memory_space<vmem>>, vector<640x128xbf16>
    %cst_28 = arith.constant dense<0.000000e+00> : vector<8x128xf32>
    %42 = tpu.matmul %40, %41, %cst_28 {dimension_numbers = #tpu.dot_dimension_numbers<[1], [0], [0], [1], [0, 0, 1, 1], [], []>} : vector<8x640xbf16>, vector<640x128xbf16>, vector<8x128xf32> -> vector<8x128xf32>
    %c0_29 = arith.constant 0 : index
    %c1536 = arith.constant 1536 : index
    %43 = vector.load %arg8[%c0_29, %c1536] : memref<1x1664xf32, #tpu.memory_space<vmem>>, vector<1x128xf32>
    %44 = vector.broadcast %43 : vector<1x128xf32> to vector<8x128xf32>
    %45 = arith.addf %42, %44 : vector<8x128xf32>
    %c0_30 = arith.constant 0 : index
    %c0_31 = arith.constant 0 : index
    %46 = vector.load %arg9[%c0_30, %c0_31] : memref<8x128xf32, #tpu.memory_space<vmem>>, vector<8x128xf32>
    tpu.vector_store %arg9[%c0_30, %c0_31], %45 {strides = array<i32>} : memref<8x128xf32, #tpu.memory_space<vmem>>, vector<8x128xf32>,
    return
  }
  func.func @transform_0(%arg0: i32) -> (i32, i32) {
    %c0_i32 = arith.constant 0 : i32
    %c0_i32_0 = arith.constant 0 : i32
    return %arg0, %c0_i32 : i32, i32
  }
  func.func @transform_1(%arg0: i32) -> (i32, i32) {
    %c0_i32 = arith.constant 0 : i32
    %c0_i32_0 = arith.constant 0 : i32
    %c0_i32_1 = arith.constant 0 : i32
    return %c0_i32, %c0_i32_0 : i32, i32
  }
  func.func @transform_2(%arg0: i32) -> (i32, i32) {
    %c0_i32 = arith.constant 0 : i32
    %c0_i32_0 = arith.constant 0 : i32
    %c0_i32_1 = arith.constant 0 : i32
    return %c0_i32, %c0_i32_0 : i32, i32
  }
  func.func @transform_3(%arg0: i32) -> (i32, i32) {
    %c0_i32 = arith.constant 0 : i32
    %c0_i32_0 = arith.constant 0 : i32
    %c0_i32_1 = arith.constant 0 : i32
    return %c0_i32, %c0_i32_0 : i32, i32
  }
  func.func @transform_4(%arg0: i32) -> (i32, i32) {
    %c0_i32 = arith.constant 0 : i32
    %c0_i32_0 = arith.constant 0 : i32
    %c0_i32_1 = arith.constant 0 : i32
    return %c0_i32, %c0_i32_0 : i32, i32
  }
  func.func @transform_5(%arg0: i32) -> (i32, i32) {
    %c0_i32 = arith.constant 0 : i32
    %c0_i32_0 = arith.constant 0 : i32
    %c0_i32_1 = arith.constant 0 : i32
    return %c0_i32, %c0_i32_0 : i32, i32
  }
  func.func @transform_6(%arg0: i32) -> (i32, i32) {
    %c0_i32 = arith.constant 0 : i32
    %c0_i32_0 = arith.constant 0 : i32
    %c0_i32_1 = arith.constant 0 : i32
    return %c0_i32, %c0_i32_0 : i32, i32
  }
  func.func @transform_7(%arg0: i32) -> (i32, i32) {
    %c0_i32 = arith.constant 0 : i32
    %c0_i32_0 = arith.constant 0 : i32
    %c0_i32_1 = arith.constant 0 : i32
    return %c0_i32, %c0_i32_0 : i32, i32
  }
  func.func @transform_8(%arg0: i32) -> (i32, i32) {
    %c0_i32 = arith.constant 0 : i32
    %c0_i32_0 = arith.constant 0 : i32
    return %arg0, %c0_i32 : i32, i32
  }
}

</mosaic_0001>

<llo_original>
// kernel: _mlp_pallas.1
$region0: #{_mlp_pallas.1}
  #allocation0 [shape = 'u32[]', space=smem, size = 0x4, offset = 0x4, fixed_abs, tag = 'smem constant byte address 0x4 - core index']
  #allocation1 [shape = 'u32[144,128]{1,0:T(1,128)}', space=vmem, size = 0x12000, scoped, tag = 'internal scratch']
  %s0 = inlined_call_operand.hbm [shape: bf16[8,128], index: 0, kind: input, shape index: {}]
  %s1 = inlined_call_operand.hbm [shape: bf16[128,128], index: 1, kind: input, shape index: {}]
  %s2 = inlined_call_operand.hbm [shape: bf16[128,128], index: 2, kind: input, shape index: {}]
  %s3 = inlined_call_operand.hbm [shape: bf16[128,256], index: 3, kind: input, shape index: {}]
  %s4 = inlined_call_operand.hbm [shape: bf16[256,384], index: 4, kind: input, shape index: {}]
  %s5 = inlined_call_operand.hbm [shape: bf16[384,640], index: 5, kind: input, shape index: {}]
  %s6 = inlined_call_operand.hbm [shape: bf16[640,128], index: 6, kind: input, shape index: {}]
  %s7 = inlined_call_operand.vmem [shape: f32[1,1664], index: 7, kind: input, shape index: {}]
  %s8 = inlined_call_operand.hbm [shape: f32[8,128], index: 8, kind: output, shape index: {}]
  %s9 = sld [smem:[#allocation0]]
  $region70: #{_mlp_pallas.1} parent=0
    _
  %s11 = ssub.s32 1, %s9
  %s12 = scalar_select 0, %s11, %s9
  $region1: #{_mlp_pallas.1} parent=0
    #allocation2 [shape = 'u8[2048]{0}', space=vmem, size = 0x800, scoped, tag = 'input window, operand 0, single buffered']
    #allocation3 [shape = 's32[1]{0}', space=sflag, size = 0x4, scoped, tag = 'scoped memory for _mlp_pallas.1']
    #allocation4 [shape = 's32[1]{0}', space=sflag, size = 0x4, scoped, tag = 'scoped memory for _mlp_pallas.1']
    #allocation5 [shape = 'u8[32768]{0}', space=vmem, size = 0x8000, scoped, tag = 'input window, operand 1, single buffered']
    #allocation6 [shape = 's32[1]{0}', space=sflag, size = 0x4, scoped, tag = 'scoped memory for _mlp_pallas.1']
    #allocation7 [shape = 'u8[32768]{0}', space=vmem, size = 0x8000, scoped, tag = 'input window, operand 2, single buffered']
    #allocation8 [shape = 'u8[65536]{0}', space=vmem, size = 0x10000, scoped, tag = 'input window, operand 3, single buffered']
    #allocation9 [shape = 's32[1]{0}', space=sflag, size = 0x4, scoped, tag = 'scoped memory for _mlp_pallas.1']
    #allocation10 [shape = 'u8[196608]{0}', space=vmem, size = 0x30000, scoped, tag = 'input window, operand 4, single buffered']
    #allocation11 [shape = 'u8[491520]{0}', space=vmem, size = 0x78000, scoped, tag = 'input window, operand 5, single buffered']
    #allocation12 [shape = 's32[1]{0}', space=sflag, size = 0x4, scoped, tag = 'scoped memory for _mlp_pallas.1']
    #allocation13 [shape = 'u8[163840]{0}', space=vmem, size = 0x28000, scoped, tag = 'input window, operand 6, single buffered']
    #allocation14 [shape = 'u8[4096]{0}', space=vmem, size = 0x1000, scoped, tag = 'output window, operand 0, single buffered']
    %13 = vsyncpa [#allocation3], 0
    %14 = vsyncpa [#allocation6], 0
    %15 = vsyncpa [#allocation9], 0
    %16 = vsyncpa [#allocation12], 0
    %17 = vsyncpa [#allocation4], 0
    // Predicated region
    $region2: #{_mlp_pallas.1} parent=1 // pred_check
      _
    $region3: #{_mlp_pallas.1} parent=1 // pred_check_branch
      %19 = sbr.rel (0) target = $region5
    $region4: #{_mlp_pallas.1} parent=1 // pred_region
      %s21 = ssub.s32 64, 64
      %22 = vsyncadd [#allocation3], %s21
      %s24 = sshll.u32 [#allocation2], 4
      %s25 = int_to_ptr.vmem [resolvable:$true] %s24
      %27 = dma.hbm_to_vmem [thread:$0]  %s0, 64, %s25, [#allocation3]
    $region5: #{_mlp_pallas.1} parent=1 // pred_fallthru
      _
    // Predicated region
    $region6: #{_mlp_pallas.1} parent=1 // pred_check
      _
    $region7: #{_mlp_pallas.1} parent=1 // pred_check_branch
      %29 = sbr.rel (0) target = $region9
    $region8: #{_mlp_pallas.1} parent=1 // pred_region
      %s31 = ssub.s32 1024, 1024
      %32 = vsyncadd [#allocation6], %s31
      %s33 = sshll.u32 [#allocation5], 4
      %s34 = int_to_ptr.vmem [resolvable:$true] %s33
      %39 = dma.hbm_to_vmem [thread:$0]  %s1, 1024, %s34, [#allocation6], 64, 64, 4
    $region9: #{_mlp_pallas.1} parent=1 // pred_fallthru
      _
    // Predicated region
    $region10: #{_mlp_pallas.1} parent=1 // pred_check
      _
    $region11: #{_mlp_pallas.1} parent=1 // pred_check_branch
      %41 = sbr.rel (0) target = $region13
    $region12: #{_mlp_pallas.1} parent=1 // pred_region
      %s43 = ssub.s32 1024, 1024
      %44 = vsyncadd [#allocation6], %s43
      %s45 = sshll.u32 [#allocation7], 4
      %s46 = int_to_ptr.vmem [resolvable:$true] %s45
      %51 = dma.hbm_to_vmem [thread:$0]  %s2, 1024, %s46, [#allocation6], 64, 64, 4
    $region13: #{_mlp_pallas.1} parent=1 // pred_fallthru
      _
    // Predicated region
    $region14: #{_mlp_pallas.1} parent=1 // pred_check
      _
    $region15: #{_mlp_pallas.1} parent=1 // pred_check_branch
      %53 = sbr.rel (0) target = $region17
    $region16: #{_mlp_pallas.1} parent=1 // pred_region
      %s55 = ssub.s32 2048, 2048
      %56 = vsyncadd [#allocation9], %s55
      %s57 = sshll.u32 [#allocation8], 4
      %s58 = int_to_ptr.vmem [resolvable:$true] %s57
      %63 = dma.hbm_to_vmem [thread:$0]  %s3, 2048, %s58, [#allocation9], 128, 128, 8
    $region17: #{_mlp_pallas.1} parent=1 // pred_fallthru
      _
    // Predicated region
    $region18: #{_mlp_pallas.1} parent=1 // pred_check
      _
    $region19: #{_mlp_pallas.1} parent=1 // pred_check_branch
      %65 = sbr.rel (0) target = $region21
    $region20: #{_mlp_pallas.1} parent=1 // pred_region
      %s67 = ssub.s32 6144, 6144
      %68 = vsyncadd [#allocation9], %s67
      %s69 = sshll.u32 [#allocation10], 4
      %s70 = int_to_ptr.vmem [resolvable:$true] %s69
      %75 = dma.hbm_to_vmem [thread:$0]  %s4, 6144, %s70, [#allocation9], 192, 192, 12
    $region21: #{_mlp_pallas.1} parent=1 // pred_fallthru
      _
    // Predicated region
    $region22: #{_mlp_pallas.1} parent=1 // pred_check
      _
    $region23: #{_mlp_pallas.1} parent=1 // pred_check_branch
      %77 = sbr.rel (0) target = $region25
    $region24: #{_mlp_pallas.1} parent=1 // pred_region
      %s79 = ssub.s32 15360, 15360
      %80 = vsyncadd [#allocation12], %s79
      %s81 = sshll.u32 [#allocation11], 4
      %s82 = int_to_ptr.vmem [resolvable:$true] %s81
      %87 = dma.hbm_to_vmem [thread:$0]  %s5, 15360, %s82, [#allocation12], 320, 320, 20
    $region25: #{_mlp_pallas.1} parent=1 // pred_fallthru
      _
    // Predicated region
    $region26: #{_mlp_pallas.1} parent=1 // pred_check
      _
    $region27: #{_mlp_pallas.1} parent=1 // pred_check_branch
      %89 = sbr.rel (0) target = $region29
    $region28: #{_mlp_pallas.1} parent=1 // pred_region
      %s91 = ssub.s32 5120, 5120
      %92 = vsyncadd [#allocation12], %s91
      %s93 = sshll.u32 [#allocation13], 4
      %s94 = int_to_ptr.vmem [resolvable:$true] %s93
      %99 = dma.hbm_to_vmem [thread:$0]  %s6, 5120, %s94, [#allocation12], 64, 64, 4
    $region29: #{_mlp_pallas.1} parent=1 // pred_fallthru
      _
    // Predicated region
    $region30: #{_mlp_pallas.1} parent=1 // pred_check
      _
    $region31: #{_mlp_pallas.1} parent=1 // pred_check_branch
      %101 = sbr.rel (0) target = $region33
    $region32: #{_mlp_pallas.1} parent=1 // pred_region
      _
    $region33: #{_mlp_pallas.1} parent=1 // pred_fallthru
      _
    // Predicated region
    $region34: #{_mlp_pallas.1} parent=1 // pred_check
      _
    $region35: #{_mlp_pallas.1} parent=1 // pred_check_branch
      %103 = sbr.rel (0) target = $region37
    $region36: #{_mlp_pallas.1} parent=1 // pred_region
      %104 = dma.done [#allocation3], 64
    $region37: #{_mlp_pallas.1} parent=1 // pred_fallthru
      _
    // Predicated region
    $region38: #{_mlp_pallas.1} parent=1 // pred_check
      _
    $region39: #{_mlp_pallas.1} parent=1 // pred_check_branch
      %106 = sbr.rel (0) target = $region41
    $region40: #{_mlp_pallas.1} parent=1 // pred_region
      %107 = dma.done [#allocation6], 1024
    $region41: #{_mlp_pallas.1} parent=1 // pred_fallthru
      _
    // Predicated region
    $region42: #{_mlp_pallas.1} parent=1 // pred_check
      _
    $region43: #{_mlp_pallas.1} parent=1 // pred_check_branch
      %109 = sbr.rel (0) target = $region45
    $region44: #{_mlp_pallas.1} parent=1 // pred_region
      %110 = dma.done [#allocation6], 1024
    $region45: #{_mlp_pallas.1} parent=1 // pred_fallthru
      _
    // Predicated region
    $region46: #{_mlp_pallas.1} parent=1 // pred_check
      _
    $region47: #{_mlp_pallas.1} parent=1 // pred_check_branch
      %112 = sbr.rel (0) target = $region49
    $region48: #{_mlp_pallas.1} parent=1 // pred_region
      %113 = dma.done [#allocation9], 2048
    $region49: #{_mlp_pallas.1} parent=1 // pred_fallthru
      _
    // Predicated region
    $region50: #{_mlp_pallas.1} parent=1 // pred_check
      _
    $region51: #{_mlp_pallas.1} parent=1 // pred_check_branch
      %115 = sbr.rel (0) target = $region53
    $region52: #{_mlp_pallas.1} parent=1 // pred_region
      %116 = dma.done [#allocation9], 6144
    $region53: #{_mlp_pallas.1} parent=1 // pred_fallthru
      _
    // Predicated region
    $region54: #{_mlp_pallas.1} parent=1 // pred_check
      _
    $region55: #{_mlp_pallas.1} parent=1 // pred_check_branch
      %118 = sbr.rel (0) target = $region57
    $region56: #{_mlp_pallas.1} parent=1 // pred_region
      %119 = dma.done [#allocation12], 15360
    $region57: #{_mlp_pallas.1} parent=1 // pred_fallthru
      _
    // Predicated region
    $region58: #{_mlp_pallas.1} parent=1 // pred_check
      _
    $region59: #{_mlp_pallas.1} parent=1 // pred_check_branch
      %121 = sbr.rel (0) target = $region61
    $region60: #{_mlp_pallas.1} parent=1 // pred_region
      %122 = dma.done [#allocation12], 5120
    $region61: #{_mlp_pallas.1} parent=1 // pred_fallthru
      _
    %v124 = vld [vmem:[#allocation2] sm:$0xf]
    %v125 = vld [vmem:[#allocation5] sm:$0xf]
    %v126 = vld [vmem:[#allocation5 + $0x4] sm:$0xf]
    %v127 = vld [vmem:[#allocation5 + $0x8] sm:$0xf]
    %v128 = vld [vmem:[#allocation5 + $0xc] sm:$0xf]
    %v129 = vld [vmem:[#allocation5 + $0x10] sm:$0xf]
    %v130 = vld [vmem:[#allocation5 + $0x14] sm:$0xf]
    %v131 = vld [vmem:[#allocation5 + $0x18] sm:$0xf]
    %v132 = vld [vmem:[#allocation5 + $0x1c] sm:$0xf]
    %v133 = vld [vmem:[#allocation5 + $0x20] sm:$0xf]
    %v134 = vld [vmem:[#allocation5 + $0x24] sm:$0xf]
    %v135 = vld [vmem:[#allocation5 + $0x28] sm:$0xf]
    %v136 = vld [vmem:[#allocation5 + $0x2c] sm:$0xf]
    %v137 = vld [vmem:[#allocation5 + $0x30] sm:$0xf]
    %v138 = vld [vmem:[#allocation5 + $0x34] sm:$0xf]
    %v139 = vld [vmem:[#allocation5 + $0x38] sm:$0xf]
    %v140 = vld [vmem:[#allocation5 + $0x3c] sm:$0xf]
    %v141 = vld [vmem:[%s7] sm:$0x1]
    %v143 = vlaneseq
    %v144 = vshrl.u32 %v143, 7
    %v145 = vsub.s32 0, %v144
    %v146 = vrot.slane %v141, %v145
    %v164 = vunpack.c.l.b16 %v125
    %v165 = vunpack.c.l.b16 %v126
    %v166 = vunpack.c.l.b16 %v127
    %v167 = vunpack.c.l.b16 %v128
    %v168 = vunpack.c.l.b16 %v129
    %v169 = vunpack.c.l.b16 %v130
    %v170 = vunpack.c.l.b16 %v131
    %v171 = vunpack.c.l.b16 %v132
    %v172 = vunpack.c.l.b16 %v133
    %v173 = vunpack.c.l.b16 %v134
    %v174 = vunpack.c.l.b16 %v135
    %v175 = vunpack.c.l.b16 %v136
    %v176 = vunpack.c.l.b16 %v137
    %v177 = vunpack.c.l.b16 %v138
    %v178 = vunpack.c.l.b16 %v139
    %v179 = vunpack.c.l.b16 %v140
    %v180 = vpack.c.b16 %v165, %v164
    %v181 = vpack.c.b16 %v167, %v166
    %v182 = vpack.c.b16 %v169, %v168
    %v183 = vpack.c.b16 %v171, %v170
    %v184 = vpack.c.b16 %v173, %v172
    %v185 = vpack.c.b16 %v175, %v174
    %v186 = vpack.c.b16 %v177, %v176
    %v187 = vpack.c.b16 %v179, %v178
    %196 = vmatprep.subr.bf16.mxu0 0
    %197 = vmatpush1.bf16.msra.mxu0 %v180
    %198 = vmatprep.subr.bf16.mxu0 0
    %199 = vmatpush1.bf16.msra.mxu0 %v181
    %200 = vmatprep.subr.bf16.mxu0 0
    %201 = vmatpush1.bf16.msra.mxu0 %v182
    %202 = vmatprep.subr.bf16.mxu0 0
    %203 = vmatpush1.bf16.msra.mxu0 %v183
    %204 = vmatprep.subr.bf16.mxu0 0
    %205 = vmatpush1.bf16.msra.mxu0 %v184
    %206 = vmatprep.subr.bf16.mxu0 0
    %207 = vmatpush1.bf16.msra.mxu0 %v185
    %208 = vmatprep.subr.bf16.mxu0 0
    %209 = vmatpush1.bf16.msra.mxu0 %v186
    %210 = vmatprep.subr.bf16.mxu0 0
    %211 = vmatpush1.bf16.msra.mxu0 %v187
    %212 = vmatprep.subr.bf16.mxu0 0
    %213 = vmatpush1.bf16.msra.mxu0 0
    %214 = vmatprep.subr.bf16.mxu0 0
    %215 = vmatpush1.bf16.msra.mxu0 0
    %216 = vmatprep.subr.bf16.mxu0 0
    %217 = vmatpush1.bf16.msra.mxu0 0
    %218 = vmatprep.subr.bf16.mxu0 0
    %219 = vmatpush1.bf16.msra.mxu0 0
    %220 = vmatprep.subr.bf16.mxu0 0
    %221 = vmatpush1.bf16.msra.mxu0 0
    %222 = vmatprep.subr.bf16.mxu0 0
    %223 = vmatpush1.bf16.msra.mxu0 0
    %224 = vmatprep.subr.bf16.mxu0 0
    %225 = vmatpush1.bf16.msra.mxu0 0
    %226 = vmatprep.subr.bf16.mxu0 0
    %227 = vmatpush1.bf16.msra.mxu0 0
    %228 = vmatprep.mubr.bf16.mxu0 0
    %229 = vmatmul.mubr.bf16.gmra.mrb[0].mxu0 %v124
    %v230 = vpop.f32.mrb[0].mxu0
    %v231 = vadd.f32 %v146, %v230
    %v232 = vpop.f32.mrb[0].mxu0
    %v233 = vpop.f32.mrb[0].mxu0
    %v234 = vpop.f32.mrb[0].mxu0
    %235 = vdwg.mxu0
    %v236 = vmax.f32 %v231, 0.0
    %v237 = vpack.c.bf16 %v236, %v236
    %v238 = vld [vmem:[#allocation7] sm:$0xf]
    %v239 = vld [vmem:[#allocation7 + $0x4] sm:$0xf]
    %v240 = vld [vmem:[#allocation7 + $0x8] sm:$0xf]
    %v241 = vld [vmem:[#allocation7 + $0xc] sm:$0xf]
    %v242 = vld [vmem:[#allocation7 + $0x10] sm:$0xf]
    %v243 = vld [vmem:[#allocation7 + $0x14] sm:$0xf]
    %v244 = vld [vmem:[#allocation7 + $0x18] sm:$0xf]
    %v245 = vld [vmem:[#allocation7 + $0x1c] sm:$0xf]
    %v246 = vld [vmem:[#allocation7 + $0x20] sm:$0xf]
    %v247 = vld [vmem:[#allocation7 + $0x24] sm:$0xf]
    %v248 = vld [vmem:[#allocation7 + $0x28] sm:$0xf]
    %v249 = vld [vmem:[#allocation7 + $0x2c] sm:$0xf]
    %v250 = vld [vmem:[#allocation7 + $0x30] sm:$0xf]
    %v251 = vld [vmem:[#allocation7 + $0x34] sm:$0xf]
    %v252 = vld [vmem:[#allocation7 + $0x38] sm:$0xf]
    %v253 = vld [vmem:[#allocation7 + $0x3c] sm:$0xf]
    %v254 = vld [vmem:[%s7 + $0x1] sm:$0x1]
    %v256 = vlaneseq
    %v257 = vshrl.u32 %v256, 7
    %v258 = vsub.s32 0, %v257
    %v259 = vrot.slane %v254, %v258
    %v277 = vunpack.c.l.b16 %v238
    %v278 = vunpack.c.l.b16 %v239
    %v279 = vunpack.c.l.b16 %v240
    %v280 = vunpack.c.l.b16 %v241
    %v281 = vunpack.c.l.b16 %v242
    %v282 = vunpack.c.l.b16 %v243
    %v283 = vunpack.c.l.b16 %v244
    %v284 = vunpack.c.l.b16 %v245
    %v285 = vunpack.c.l.b16 %v246
    %v286 = vunpack.c.l.b16 %v247
    %v287 = vunpack.c.l.b16 %v248
    %v288 = vunpack.c.l.b16 %v249
    %v289 = vunpack.c.l.b16 %v250
    %v290 = vunpack.c.l.b16 %v251
    %v291 = vunpack.c.l.b16 %v252
    %v292 = vunpack.c.l.b16 %v253
    %v293 = vpack.c.b16 %v278, %v277
    %v294 = vpack.c.b16 %v280, %v279
    %v295 = vpack.c.b16 %v282, %v281
    %v296 = vpack.c.b16 %v284, %v283
    %v297 = vpack.c.b16 %v286, %v285
    %v298 = vpack.c.b16 %v288, %v287
    %v299 = vpack.c.b16 %v290, %v289
    %v300 = vpack.c.b16 %v292, %v291
    %309 = vmatprep.subr.bf16.mxu0 0
    %310 = vmatpush1.bf16.msra.mxu0 %v293
    %311 = vmatprep.subr.bf16.mxu0 0
    %312 = vmatpush1.bf16.msra.mxu0 %v294
    %313 = vmatprep.subr.bf16.mxu0 0
    %314 = vmatpush1.bf16.msra.mxu0 %v295
    %315 = vmatprep.subr.bf16.mxu0 0
    %316 = vmatpush1.bf16.msra.mxu0 %v296
    %317 = vmatprep.subr.bf16.mxu0 0
    %318 = vmatpush1.bf16.msra.mxu0 %v297
    %319 = vmatprep.subr.bf16.mxu0 0
    %320 = vmatpush1.bf16.msra.mxu0 %v298
    %321 = vmatprep.subr.bf16.mxu0 0
    %322 = vmatpush1.bf16.msra.mxu0 %v299
    %323 = vmatprep.subr.bf16.mxu0 0
    %324 = vmatpush1.bf16.msra.mxu0 %v300
    %325 = vmatprep.subr.bf16.mxu0 0
    %326 = vmatpush1.bf16.msra.mxu0 0
    %327 = vmatprep.subr.bf16.mxu0 0
    %328 = vmatpush1.bf16.msra.mxu0 0
    %329 = vmatprep.subr.bf16.mxu0 0
    %330 = vmatpush1.bf16.msra.mxu0 0
    %331 = vmatprep.subr.bf16.mxu0 0
    %332 = vmatpush1.bf16.msra.mxu0 0
    %333 = vmatprep.subr.bf16.mxu0 0
    %334 = vmatpush1.bf16.msra.mxu0 0
    %335 = vmatprep.subr.bf16.mxu0 0
    %336 = vmatpush1.bf16.msra.mxu0 0
    %337 = vmatprep.subr.bf16.mxu0 0
    %338 = vmatpush1.bf16.msra.mxu0 0
    %339 = vmatprep.subr.bf16.mxu0 0
    %340 = vmatpush1.bf16.msra.mxu0 0
    %341 = vmatprep.mubr.bf16.mxu0 0
    %342 = vmatmul.mubr.bf16.gmra.mrb[0].mxu0 %v237
    %v343 = vpop.f32.mrb[0].mxu0
    %v344 = vadd.f32 %v259, %v343
    %v345 = vpop.f32.mrb[0].mxu0
    %v346 = vpop.f32.mrb[0].mxu0
    %v347 = vpop.f32.mrb[0].mxu0
    %348 = vdwg.mxu0
    %v349 = vmax.f32 %v344, 0.0
    %v350 = vpack.c.bf16 %v349, %v349
    %v351 = vld [vmem:[#allocation8] sm:$0xff]
    %v352 = vld [vmem:[#allocation8 + $0x8] sm:$0xff]
    %v353 = vld [vmem:[#allocation8 + $0x10] sm:$0xff]
    %v354 = vld [vmem:[#allocation8 + $0x18] sm:$0xff]
    %v355 = vld [vmem:[#allocation8 + $0x20] sm:$0xff]
    %v356 = vld [vmem:[#allocation8 + $0x28] sm:$0xff]
    %v357 = vld [vmem:[#allocation8 + $0x30] sm:$0xff]
    %v358 = vld [vmem:[#allocation8 + $0x38] sm:$0xff]
    %v359 = vld [vmem:[#allocation8 + $0x40] sm:$0xff]
    %v360 = vld [vmem:[#allocation8 + $0x48] sm:$0xff]
    %v361 = vld [vmem:[#allocation8 + $0x50] sm:$0xff]
    %v362 = vld [vmem:[#allocation8 + $0x58] sm:$0xff]
    %v363 = vld [vmem:[#allocation8 + $0x60] sm:$0xff]
    %v364 = vld [vmem:[#allocation8 + $0x68] sm:$0xff]
    %v365 = vld [vmem:[#allocation8 + $0x70] sm:$0xff]
    %v366 = vld [vmem:[#allocation8 + $0x78] sm:$0xff]
    %v367 = vld [vmem:[%s7 + $0x2] sm:$0x3]
    %v369 = vlaneseq
    %v370 = vshrl.u32 %v369, 7
    %v371 = vsub.s32 0, %v370
    %v372 = vrot.slane %v367, %v371
    %v373 = vlaneseq
    %v374 = vshrl.u32 %v373, 7
    %v375 = vsub.s32 1, %v374
    %v376 = vrot.slane %v367, %v375
    %v395 = vunpack.c.l.b16 %v351
    %v396 = vunpack.c.h.b16 %v351
    %v397 = vunpack.c.l.b16 %v352
    %v398 = vunpack.c.h.b16 %v352
    %v399 = vunpack.c.l.b16 %v353
    %v400 = vunpack.c.h.b16 %v353
    %v401 = vunpack.c.l.b16 %v354
    %v402 = vunpack.c.h.b16 %v354
    %v403 = vunpack.c.l.b16 %v355
    %v404 = vunpack.c.h.b16 %v355
    %v405 = vunpack.c.l.b16 %v356
    %v406 = vunpack.c.h.b16 %v356
    %v407 = vunpack.c.l.b16 %v357
    %v408 = vunpack.c.h.b16 %v357
    %v409 = vunpack.c.l.b16 %v358
    %v410 = vunpack.c.h.b16 %v358
    %v411 = vunpack.c.l.b16 %v359
    %v412 = vunpack.c.h.b16 %v359
    %v413 = vunpack.c.l.b16 %v360
    %v414 = vunpack.c.h.b16 %v360
    %v415 = vunpack.c.l.b16 %v361
    %v416 = vunpack.c.h.b16 %v361
    %v417 = vunpack.c.l.b16 %v362
    %v418 = vunpack.c.h.b16 %v362
    %v419 = vunpack.c.l.b16 %v363
    %v420 = vunpack.c.h.b16 %v363
    %v421 = vunpack.c.l.b16 %v364
    %v422 = vunpack.c.h.b16 %v364
    %v423 = vunpack.c.l.b16 %v365
    %v424 = vunpack.c.h.b16 %v365
    %v425 = vunpack.c.l.b16 %v366
    %v426 = vunpack.c.h.b16 %v366
    %v427 = vpack.c.b16 %v397, %v395
    %v428 = vpack.c.b16 %v398, %v396
    %v429 = vpack.c.b16 %v401, %v399
    %v430 = vpack.c.b16 %v402, %v400
    %v431 = vpack.c.b16 %v405, %v403
    %v432 = vpack.c.b16 %v406, %v404
    %v433 = vpack.c.b16 %v409, %v407
    %v434 = vpack.c.b16 %v410, %v408
    %v435 = vpack.c.b16 %v413, %v411
    %v436 = vpack.c.b16 %v414, %v412
    %v437 = vpack.c.b16 %v417, %v415
    %v438 = vpack.c.b16 %v418, %v416
    %v439 = vpack.c.b16 %v421, %v419
    %v440 = vpack.c.b16 %v422, %v420
    %v441 = vpack.c.b16 %v425, %v423
    %v442 = vpack.c.b16 %v426, %v424
    %459 = vmatprep.subr.bf16.mxu0 %v428
    %460 = vmatpush1.bf16.msra.mxu0 %v427
    %461 = vmatprep.subr.bf16.mxu0 %v430
    %462 = vmatpush1.bf16.msra.mxu0 %v429
    %463 = vmatprep.subr.bf16.mxu0 %v432
    %464 = vmatpush1.bf16.msra.mxu0 %v431
    %465 = vmatprep.subr.bf16.mxu0 %v434
    %466 = vmatpush1.bf16.msra.mxu0 %v433
    %467 = vmatprep.subr.bf16.mxu0 %v436
    %468 = vmatpush1.bf16.msra.mxu0 %v435
    %469 = vmatprep.subr.bf16.mxu0 %v438
    %470 = vmatpush1.bf16.msra.mxu0 %v437
    %471 = vmatprep.subr.bf16.mxu0 %v440
    %472 = vmatpush1.bf16.msra.mxu0 %v439
    %473 = vmatprep.subr.bf16.mxu0 %v442
    %474 = vmatpush1.bf16.msra.mxu0 %v441
    %475 = vmatprep.subr.bf16.mxu0 0
    %476 = vmatpush1.bf16.msra.mxu0 0
    %477 = vmatprep.subr.bf16.mxu0 0
    %478 = vmatpush1.bf16.msra.mxu0 0
    %479 = vmatprep.subr.bf16.mxu0 0
    %480 = vmatpush1.bf16.msra.mxu0 0
    %481 = vmatprep.subr.bf16.mxu0 0
    %482 = vmatpush1.bf16.msra.mxu0 0
    %483 = vmatprep.subr.bf16.mxu0 0
    %484 = vmatpush1.bf16.msra.mxu0 0
    %485 = vmatprep.subr.bf16.mxu0 0
    %486 = vmatpush1.bf16.msra.mxu0 0
    %487 = vmatprep.subr.bf16.mxu0 0
    %488 = vmatpush1.bf16.msra.mxu0 0
    %489 = vmatprep.subr.bf16.mxu0 0
    %490 = vmatpush1.bf16.msra.mxu0 0
    %491 = vmatprep.mubr.bf16.mxu0 0
    %492 = vmatmul.mubr.bf16.gmra.mrb[0].mxu0 %v350
    %v493 = vpop.f32.mrb[0].mxu0
    %v494 = vadd.f32 %v372, %v493
    %v495 = vpop.f32.mrb[0].mxu0
    %v496 = vadd.f32 %v376, %v495
    %v497 = vpop.f32.mrb[0].mxu0
    %v498 = vpop.f32.mrb[0].mxu0
    %499 = vdwg.mxu0
    %v500 = vmax.f32 %v494, 0.0
    %v501 = vmax.f32 %v496, 0.0
    %v502 = vpack.c.bf16 %v500, %v500
    %v503 = vpack.c.bf16 %v501, %v501
    %v504 = vld [vmem:[#allocation10] sm:$0xff]
    %v505 = vld [vmem:[#allocation10 + $0x8] sm:$0xf]
    %v506 = vld [vmem:[#allocation10 + $0xc] sm:$0xff]
    %v507 = vld [vmem:[#allocation10 + $0x14] sm:$0xf]
    %v508 = vld [vmem:[#allocation10 + $0x18] sm:$0xff]
    %v509 = vld [vmem:[#allocation10 + $0x20] sm:$0xf]
    %v510 = vld [vmem:[#allocation10 + $0x24] sm:$0xff]
    %v511 = vld [vmem:[#allocation10 + $0x2c] sm:$0xf]
    %v512 = vld [vmem:[#allocation10 + $0x30] sm:$0xff]
    %v513 = vld [vmem:[#allocation10 + $0x38] sm:$0xf]
    %v514 = vld [vmem:[#allocation10 + $0x3c] sm:$0xff]
    %v515 = vld [vmem:[#allocation10 + $0x44] sm:$0xf]
    %v516 = vld [vmem:[#allocation10 + $0x48] sm:$0xff]
    %v517 = vld [vmem:[#allocation10 + $0x50] sm:$0xf]
    %v518 = vld [vmem:[#allocation10 + $0x54] sm:$0xff]
    %v519 = vld [vmem:[#allocation10 + $0x5c] sm:$0xf]
    %v520 = vld [vmem:[#allocation10 + $0x60] sm:$0xff]
    %v521 = vld [vmem:[#allocation10 + $0x68] sm:$0xf]
    %v522 = vld [vmem:[#allocation10 + $0x6c] sm:$0xff]
    %v523 = vld [vmem:[#allocation10 + $0x74] sm:$0xf]
    %v524 = vld [vmem:[#allocation10 + $0x78] sm:$0xff]
    %v525 = vld [vmem:[#allocation10 + $0x80] sm:$0xf]
    %v526 = vld [vmem:[#allocation10 + $0x84] sm:$0xff]
    %v527 = vld [vmem:[#allocation10 + $0x8c] sm:$0xf]
    %v528 = vld [vmem:[#allocation10 + $0x90] sm:$0xff]
    %v529 = vld [vmem:[#allocation10 + $0x98] sm:$0xf]
    %v530 = vld [vmem:[#allocation10 + $0x9c] sm:$0xff]
    %v531 = vld [vmem:[#allocation10 + $0xa4] sm:$0xf]
    %v532 = vld [vmem:[#allocation10 + $0xa8] sm:$0xff]
    %v533 = vld [vmem:[#allocation10 + $0xb0] sm:$0xf]
    %v534 = vld [vmem:[#allocation10 + $0xb4] sm:$0xff]
    %v535 = vld [vmem:[#allocation10 + $0xbc] sm:$0xf]
    %v536 = vld [vmem:[#allocation10 + $0xc0] sm:$0xff]
    %v537 = vld [vmem:[#allocation10 + $0xc8] sm:$0xf]
    %v538 = vld [vmem:[#allocation10 + $0xcc] sm:$0xff]
    %v539 = vld [vmem:[#allocation10 + $0xd4] sm:$0xf]
    %v540 = vld [vmem:[#allocation10 + $0xd8] sm:$0xff]
    %v541 = vld [vmem:[#allocation10 + $0xe0] sm:$0xf]
    %v542 = vld [vmem:[#allocation10 + $0xe4] sm:$0xff]
    %v543 = vld [vmem:[#allocation10 + $0xec] sm:$0xf]
    %v544 = vld [vmem:[#allocation10 + $0xf0] sm:$0xff]
    %v545 = vld [vmem:[#allocation10 + $0xf8] sm:$0xf]
    %v546 = vld [vmem:[#allocation10 + $0xfc] sm:$0xff]
    %v547 = vld [vmem:[#allocation10 + $0x104] sm:$0xf]
    %v548 = vld [vmem:[#allocation10 + $0x108] sm:$0xff]
    %v549 = vld [vmem:[#allocation10 + $0x110] sm:$0xf]
    %v550 = vld [vmem:[#allocation10 + $0x114] sm:$0xff]
    %v551 = vld [vmem:[#allocation10 + $0x11c] sm:$0xf]
    %v552 = vld [vmem:[#allocation10 + $0x120] sm:$0xff]
    %v553 = vld [vmem:[#allocation10 + $0x128] sm:$0xf]
    %v554 = vld [vmem:[#allocation10 + $0x12c] sm:$0xff]
    %v555 = vld [vmem:[#allocation10 + $0x134] sm:$0xf]
    %v556 = vld [vmem:[#allocation10 + $0x138] sm:$0xff]
    %v557 = vld [vmem:[#allocation10 + $0x140] sm:$0xf]
    %v558 = vld [vmem:[#allocation10 + $0x144] sm:$0xff]
    %v559 = vld [vmem:[#allocation10 + $0x14c] sm:$0xf]
    %v560 = vld [vmem:[#allocation10 + $0x150] sm:$0xff]
    %v561 = vld [vmem:[#allocation10 + $0x158] sm:$0xf]
    %v562 = vld [vmem:[#allocation10 + $0x15c] sm:$0xff]
    %v563 = vld [vmem:[#allocation10 + $0x164] sm:$0xf]
    %v564 = vld [vmem:[#allocation10 + $0x168] sm:$0xff]
    %v565 = vld [vmem:[#allocation10 + $0x170] sm:$0xf]
    %v566 = vld [vmem:[#allocation10 + $0x174] sm:$0xff]
    %v567 = vld [vmem:[#allocation10 + $0x17c] sm:$0xf]
    %v568 = vld [vmem:[%s7 + $0x4] sm:$0x7]
    %v570 = vlaneseq
    %v571 = vshrl.u32 %v570, 7
    %v572 = vsub.s32 0, %v571
    %v573 = vrot.slane %v568, %v572
    %v574 = vlaneseq
    %v575 = vshrl.u32 %v574, 7
    %v576 = vsub.s32 1, %v575
    %v577 = vrot.slane %v568, %v576
    %v578 = vlaneseq
    %v579 = vshrl.u32 %v578, 7
    %v580 = vsub.s32 2, %v579
    %v581 = vrot.slane %v568, %v580
    %v649 = vunpack.c.l.b16 %v504
    %v650 = vunpack.c.h.b16 %v504
    %v651 = vunpack.c.l.b16 %v505
    %v652 = vunpack.c.l.b16 %v506
    %v653 = vunpack.c.h.b16 %v506
    %v654 = vunpack.c.l.b16 %v507
    %v655 = vunpack.c.l.b16 %v508
    %v656 = vunpack.c.h.b16 %v508
    %v657 = vunpack.c.l.b16 %v509
    %v658 = vunpack.c.l.b16 %v510
    %v659 = vunpack.c.h.b16 %v510
    %v660 = vunpack.c.l.b16 %v511
    %v661 = vunpack.c.l.b16 %v512
    %v662 = vunpack.c.h.b16 %v512
    %v663 = vunpack.c.l.b16 %v513
    %v664 = vunpack.c.l.b16 %v514
    %v665 = vunpack.c.h.b16 %v514
    %v666 = vunpack.c.l.b16 %v515
    %v667 = vunpack.c.l.b16 %v516
    %v668 = vunpack.c.h.b16 %v516
    %v669 = vunpack.c.l.b16 %v517
    %v670 = vunpack.c.l.b16 %v518
    %v671 = vunpack.c.h.b16 %v518
    %v672 = vunpack.c.l.b16 %v519
    %v673 = vunpack.c.l.b16 %v520
    %v674 = vunpack.c.h.b16 %v520
    %v675 = vunpack.c.l.b16 %v521
    %v676 = vunpack.c.l.b16 %v522
    %v677 = vunpack.c.h.b16 %v522
    %v678 = vunpack.c.l.b16 %v523
    %v679 = vunpack.c.l.b16 %v524
    %v680 = vunpack.c.h.b16 %v524
    %v681 = vunpack.c.l.b16 %v525
    %v682 = vunpack.c.l.b16 %v526
    %v683 = vunpack.c.h.b16 %v526
    %v684 = vunpack.c.l.b16 %v527
    %v685 = vunpack.c.l.b16 %v528
    %v686 = vunpack.c.h.b16 %v528
    %v687 = vunpack.c.l.b16 %v529
    %v688 = vunpack.c.l.b16 %v530
    %v689 = vunpack.c.h.b16 %v530
    %v690 = vunpack.c.l.b16 %v531
    %v691 = vunpack.c.l.b16 %v532
    %v692 = vunpack.c.h.b16 %v532
    %v693 = vunpack.c.l.b16 %v533
    %v694 = vunpack.c.l.b16 %v534
    %v695 = vunpack.c.h.b16 %v534
    %v696 = vunpack.c.l.b16 %v535
    %v697 = vunpack.c.l.b16 %v536
    %v698 = vunpack.c.h.b16 %v536
    %v699 = vunpack.c.l.b16 %v537
    %v700 = vunpack.c.l.b16 %v538
    %v701 = vunpack.c.h.b16 %v538
    %v702 = vunpack.c.l.b16 %v539
    %v703 = vunpack.c.l.b16 %v540
    %v704 = vunpack.c.h.b16 %v540
    %v705 = vunpack.c.l.b16 %v541
    %v706 = vunpack.c.l.b16 %v542
    %v707 = vunpack.c.h.b16 %v542
    %v708 = vunpack.c.l.b16 %v543
    %v709 = vunpack.c.l.b16 %v544
    %v710 = vunpack.c.h.b16 %v544
    %v711 = vunpack.c.l.b16 %v545
    %v712 = vunpack.c.l.b16 %v546
    %v713 = vunpack.c.h.b16 %v546
    %v714 = vunpack.c.l.b16 %v547
    %v715 = vunpack.c.l.b16 %v548
    %v716 = vunpack.c.h.b16 %v548
    %v717 = vunpack.c.l.b16 %v549
    %v718 = vunpack.c.l.b16 %v550
    %v719 = vunpack.c.h.b16 %v550
    %v720 = vunpack.c.l.b16 %v551
    %v721 = vunpack.c.l.b16 %v552
    %v722 = vunpack.c.h.b16 %v552
    %v723 = vunpack.c.l.b16 %v553
    %v724 = vunpack.c.l.b16 %v554
    %v725 = vunpack.c.h.b16 %v554
    %v726 = vunpack.c.l.b16 %v555
    %v727 = vunpack.c.l.b16 %v556
    %v728 = vunpack.c.h.b16 %v556
    %v729 = vunpack.c.l.b16 %v557
    %v730 = vunpack.c.l.b16 %v558
    %v731 = vunpack.c.h.b16 %v558
    %v732 = vunpack.c.l.b16 %v559
    %v733 = vunpack.c.l.b16 %v560
    %v734 = vunpack.c.h.b16 %v560
    %v735 = vunpack.c.l.b16 %v561
    %v736 = vunpack.c.l.b16 %v562
    %v737 = vunpack.c.h.b16 %v562
    %v738 = vunpack.c.l.b16 %v563
    %v739 = vunpack.c.l.b16 %v564
    %v740 = vunpack.c.h.b16 %v564
    %v741 = vunpack.c.l.b16 %v565
    %v742 = vunpack.c.l.b16 %v566
    %v743 = vunpack.c.h.b16 %v566
    %v744 = vunpack.c.l.b16 %v567
    %v745 = vpack.c.b16 %v652, %v649
    %v746 = vpack.c.b16 %v653, %v650
    %v747 = vpack.c.b16 %v654, %v651
    %v748 = vpack.c.b16 %v658, %v655
    %v749 = vpack.c.b16 %v659, %v656
    %v750 = vpack.c.b16 %v660, %v657
    %v751 = vpack.c.b16 %v664, %v661
    %v752 = vpack.c.b16 %v665, %v662
    %v753 = vpack.c.b16 %v666, %v663
    %v754 = vpack.c.b16 %v670, %v667
    %v755 = vpack.c.b16 %v671, %v668
    %v756 = vpack.c.b16 %v672, %v669
    %v757 = vpack.c.b16 %v676, %v673
    %v758 = vpack.c.b16 %v677, %v674
    %v759 = vpack.c.b16 %v678, %v675
    %v760 = vpack.c.b16 %v682, %v679
    %v761 = vpack.c.b16 %v683, %v680
    %v762 = vpack.c.b16 %v684, %v681
    %v763 = vpack.c.b16 %v688, %v685
    %v764 = vpack.c.b16 %v689, %v686
    %v765 = vpack.c.b16 %v690, %v687
    %v766 = vpack.c.b16 %v694, %v691
    %v767 = vpack.c.b16 %v695, %v692
    %v768 = vpack.c.b16 %v696, %v693
    %v769 = vpack.c.b16 %v700, %v697
    %v770 = vpack.c.b16 %v701, %v698
    %v771 = vpack.c.b16 %v702, %v699
    %v772 = vpack.c.b16 %v706, %v703
    %v773 = vpack.c.b16 %v707, %v704
    %v774 = vpack.c.b16 %v708, %v705
    %v775 = vpack.c.b16 %v712, %v709
    %v776 = vpack.c.b16 %v713, %v710
    %v777 = vpack.c.b16 %v714, %v711
    %v778 = vpack.c.b16 %v718, %v715
    %v779 = vpack.c.b16 %v719, %v716
    %v780 = vpack.c.b16 %v720, %v717
    %v781 = vpack.c.b16 %v724, %v721
    %v782 = vpack.c.b16 %v725, %v722
    %v783 = vpack.c.b16 %v726, %v723
    %v784 = vpack.c.b16 %v730, %v727
    %v785 = vpack.c.b16 %v731, %v728
    %v786 = vpack.c.b16 %v732, %v729
    %v787 = vpack.c.b16 %v736, %v733
    %v788 = vpack.c.b16 %v737, %v734
    %v789 = vpack.c.b16 %v738, %v735
    %v790 = vpack.c.b16 %v742, %v739
    %v791 = vpack.c.b16 %v743, %v740
    %v792 = vpack.c.b16 %v744, %v741
    %841 = vmatprep.subr.bf16.mxu0 %v746
    %842 = vmatpush1.bf16.msra.mxu0 %v745
    %843 = vmatprep.subr.bf16.mxu0 %v749
    %844 = vmatpush1.bf16.msra.mxu0 %v748
    %845 = vmatprep.subr.bf16.mxu0 %v752
    %846 = vmatpush1.bf16.msra.mxu0 %v751
    %847 = vmatprep.subr.bf16.mxu0 %v755
    %848 = vmatpush1.bf16.msra.mxu0 %v754
    %849 = vmatprep.subr.bf16.mxu0 %v758
    %850 = vmatpush1.bf16.msra.mxu0 %v757
    %851 = vmatprep.subr.bf16.mxu0 %v761
    %852 = vmatpush1.bf16.msra.mxu0 %v760
    %853 = vmatprep.subr.bf16.mxu0 %v764
    %854 = vmatpush1.bf16.msra.mxu0 %v763
    %855 = vmatprep.subr.bf16.mxu0 %v767
    %856 = vmatpush1.bf16.msra.mxu0 %v766
    %857 = vmatprep.subr.bf16.mxu0 %v770
    %858 = vmatpush1.bf16.msra.mxu0 %v769
    %859 = vmatprep.subr.bf16.mxu0 %v773
    %860 = vmatpush1.bf16.msra.mxu0 %v772
    %861 = vmatprep.subr.bf16.mxu0 %v776
    %862 = vmatpush1.bf16.msra.mxu0 %v775
    %863 = vmatprep.subr.bf16.mxu0 %v779
    %864 = vmatpush1.bf16.msra.mxu0 %v778
    %865 = vmatprep.subr.bf16.mxu0 %v782
    %866 = vmatpush1.bf16.msra.mxu0 %v781
    %867 = vmatprep.subr.bf16.mxu0 %v785
    %868 = vmatpush1.bf16.msra.mxu0 %v784
    %869 = vmatprep.subr.bf16.mxu0 %v788
    %870 = vmatpush1.bf16.msra.mxu0 %v787
    %871 = vmatprep.subr.bf16.mxu0 %v791
    %872 = vmatpush1.bf16.msra.mxu0 %v790
    %873 = vmatprep.mubr.bf16.mxu0 %v503
    %874 = vmatmul.mubr.bf16.gmra.mrb[0].mxu0 %v502
    %v875 = vpop.f32.mrb[0].mxu0
    %v876 = vadd.f32 %v573, %v875
    %v877 = vpop.f32.mrb[0].mxu0
    %v878 = vadd.f32 %v577, %v877
    %v879 = vpop.f32.mrb[0].mxu0
    %v880 = vpop.f32.mrb[0].mxu0
    %881 = vdwg.mxu0
    %882 = vmatprep.subr.bf16.mxu0 0
    %883 = vmatpush1.bf16.msra.mxu0 %v747
    %884 = vmatprep.subr.bf16.mxu0 0
    %885 = vmatpush1.bf16.msra.mxu0 %v750
    %886 = vmatprep.subr.bf16.mxu0 0
    %887 = vmatpush1.bf16.msra.mxu0 %v753
    %888 = vmatprep.subr.bf16.mxu0 0
    %889 = vmatpush1.bf16.msra.mxu0 %v756
    %890 = vmatprep.subr.bf16.mxu0 0
    %891 = vmatpush1.bf16.msra.mxu0 %v759
    %892 = vmatprep.subr.bf16.mxu0 0
    %893 = vmatpush1.bf16.msra.mxu0 %v762
    %894 = vmatprep.subr.bf16.mxu0 0
    %895 = vmatpush1.bf16.msra.mxu0 %v765
    %896 = vmatprep.subr.bf16.mxu0 0
    %897 = vmatpush1.bf16.msra.mxu0 %v768
    %898 = vmatprep.subr.bf16.mxu0 0
    %899 = vmatpush1.bf16.msra.mxu0 %v771
    %900 = vmatprep.subr.bf16.mxu0 0
    %901 = vmatpush1.bf16.msra.mxu0 %v774
    %902 = vmatprep.subr.bf16.mxu0 0
    %903 = vmatpush1.bf16.msra.mxu0 %v777
    %904 = vmatprep.subr.bf16.mxu0 0
    %905 = vmatpush1.bf16.msra.mxu0 %v780
    %906 = vmatprep.subr.bf16.mxu0 0
    %907 = vmatpush1.bf16.msra.mxu0 %v783
    %908 = vmatprep.subr.bf16.mxu0 0
    %909 = vmatpush1.bf16.msra.mxu0 %v786
    %910 = vmatprep.subr.bf16.mxu0 0
    %911 = vmatpush1.bf16.msra.mxu0 %v789
    %912 = vmatprep.subr.bf16.mxu0 0
    %913 = vmatpush1.bf16.msra.mxu0 %v792
    %914 = vmatprep.mubr.bf16.mxu0 %v503
    %915 = vmatmul.mubr.bf16.gmra.mrb[0].mxu0 %v502
    %v916 = vpop.f32.mrb[0].mxu0
    %v917 = vadd.f32 %v581, %v916
    %v918 = vpop.f32.mrb[0].mxu0
    %v919 = vpop.f32.mrb[0].mxu0
    %v920 = vpop.f32.mrb[0].mxu0
    %921 = vdwg.mxu0
    %v922 = vmax.f32 %v876, 0.0
    %v923 = vmax.f32 %v878, 0.0
    %v924 = vmax.f32 %v917, 0.0
    %v925 = vpack.c.bf16 %v922, %v922
    %v926 = vpack.c.bf16 %v923, %v923
    %v927 = vpack.c.bf16 %v924, %v924
    %v928 = vld [vmem:[#allocation11] sm:$0xff]
    %v929 = vld [vmem:[#allocation11 + $0x8] sm:$0xff]
    %v930 = vld [vmem:[#allocation11 + $0x10] sm:$0xf]
    %v931 = vld [vmem:[#allocation11 + $0x14] sm:$0xff]
    %v932 = vld [vmem:[#allocation11 + $0x1c] sm:$0xff]
    %v933 = vld [vmem:[#allocation11 + $0x24] sm:$0xf]
    %v934 = vld [vmem:[#allocation11 + $0x28] sm:$0xff]
    %v935 = vld [vmem:[#allocation11 + $0x30] sm:$0xff]
    %v936 = vld [vmem:[#allocation11 + $0x38] sm:$0xf]
    %v937 = vld [vmem:[#allocation11 + $0x3c] sm:$0xff]
    %v938 = vld [vmem:[#allocation11 + $0x44] sm:$0xff]
    %v939 = vld [vmem:[#allocation11 + $0x4c] sm:$0xf]
    %v940 = vld [vmem:[#allocation11 + $0x50] sm:$0xff]
    %v941 = vld [vmem:[#allocation11 + $0x58] sm:$0xff]
    %v942 = vld [vmem:[#allocation11 + $0x60] sm:$0xf]
    %v943 = vld [vmem:[#allocation11 + $0x64] sm:$0xff]
    %v944 = vld [vmem:[#allocation11 + $0x6c] sm:$0xff]
    %v945 = vld [vmem:[#allocation11 + $0x74] sm:$0xf]
    %v946 = vld [vmem:[#allocation11 + $0x78] sm:$0xff]
    %v947 = vld [vmem:[#allocation11 + $0x80] sm:$0xff]
    %v948 = vld [vmem:[#allocation11 + $0x88] sm:$0xf]
    %v949 = vld [vmem:[#allocation11 + $0x8c] sm:$0xff]
    %v950 = vld [vmem:[#allocation11 + $0x94] sm:$0xff]
    %v951 = vld [vmem:[#allocation11 + $0x9c] sm:$0xf]
    %v952 = vld [vmem:[#allocation11 + $0xa0] sm:$0xff]
    %v953 = vld [vmem:[#allocation11 + $0xa8] sm:$0xff]
    %v954 = vld [vmem:[#allocation11 + $0xb0] sm:$0xf]
    %v955 = vld [vmem:[#allocation11 + $0xb4] sm:$0xff]
    %v956 = vld [vmem:[#allocation11 + $0xbc] sm:$0xff]
    %v957 = vld [vmem:[#allocation11 + $0xc4] sm:$0xf]
    %v958 = vld [vmem:[#allocation11 + $0xc8] sm:$0xff]
    %v959 = vld [vmem:[#allocation11 + $0xd0] sm:$0xff]
    %v960 = vld [vmem:[#allocation11 + $0xd8] sm:$0xf]
    %v961 = vld [vmem:[#allocation11 + $0xdc] sm:$0xff]
    %v962 = vld [vmem:[#allocation11 + $0xe4] sm:$0xff]
    %v963 = vld [vmem:[#allocation11 + $0xec] sm:$0xf]
    %v964 = vld [vmem:[#allocation11 + $0xf0] sm:$0xff]
    %v965 = vld [vmem:[#allocation11 + $0xf8] sm:$0xff]
    %v966 = vld [vmem:[#allocation11 + $0x100] sm:$0xf]
    %v967 = vld [vmem:[#allocation11 + $0x104] sm:$0xff]
    %v968 = vld [vmem:[#allocation11 + $0x10c] sm:$0xff]
    %v969 = vld [vmem:[#allocation11 + $0x114] sm:$0xf]
    %v970 = vld [vmem:[#allocation11 + $0x118] sm:$0xff]
    %v971 = vld [vmem:[#allocation11 + $0x120] sm:$0xff]
    %v972 = vld [vmem:[#allocation11 + $0x128] sm:$0xf]
    %v973 = vld [vmem:[#allocation11 + $0x12c] sm:$0xff]
    %v974 = vld [vmem:[#allocation11 + $0x134] sm:$0xff]
    %v975 = vld [vmem:[#allocation11 + $0x13c] sm:$0xf]
    %v976 = vld [vmem:[#allocation11 + $0x140] sm:$0xff]
    %v977 = vld [vmem:[#allocation11 + $0x148] sm:$0xff]
    %v978 = vld [vmem:[#allocation11 + $0x150] sm:$0xf]
    %v979 = vld [vmem:[#allocation11 + $0x154] sm:$0xff]
    %v980 = vld [vmem:[#allocation11 + $0x15c] sm:$0xff]
    %v981 = vld [vmem:[#allocation11 + $0x164] sm:$0xf]
    %v982 = vld [vmem:[#allocation11 + $0x168] sm:$0xff]
    %v983 = vld [vmem:[#allocation11 + $0x170] sm:$0xff]
    %v984 = vld [vmem:[#allocation11 + $0x178] sm:$0xf]
    %v985 = vld [vmem:[#allocation11 + $0x17c] sm:$0xff]
    %v986 = vld [vmem:[#allocation11 + $0x184] sm:$0xff]
    %v987 = vld [vmem:[#allocation11 + $0x18c] sm:$0xf]
    %v988 = vld [vmem:[#allocation11 + $0x190] sm:$0xff]
    %v989 = vld [vmem:[#allocation11 + $0x198] sm:$0xff]
    %v990 = vld [vmem:[#allocation11 + $0x1a0] sm:$0xf]
    %v991 = vld [vmem:[#allocation11 + $0x1a4] sm:$0xff]
    %v992 = vld [vmem:[#allocation11 + $0x1ac] sm:$0xff]
    %v993 = vld [vmem:[#allocation11 + $0x1b4] sm:$0xf]
    %v994 = vld [vmem:[#allocation11 + $0x1b8] sm:$0xff]
    %v995 = vld [vmem:[#allocation11 + $0x1c0] sm:$0xff]
    %v996 = vld [vmem:[#allocation11 + $0x1c8] sm:$0xf]
    %v997 = vld [vmem:[#allocation11 + $0x1cc] sm:$0xff]
    %v998 = vld [vmem:[#allocation11 + $0x1d4] sm:$0xff]
    %v999 = vld [vmem:[#allocation11 + $0x1dc] sm:$0xf]
    %v1000 = vld [vmem:[#allocation11 + $0x1e0] sm:$0xff]
    %v1001 = vld [vmem:[#allocation11 + $0x1e8] sm:$0xff]
    %v1002 = vld [vmem:[#allocation11 + $0x1f0] sm:$0xf]
    %v1003 = vld [vmem:[#allocation11 + $0x1f4] sm:$0xff]
    %v1004 = vld [vmem:[#allocation11 + $0x1fc] sm:$0xff]
    %v1005 = vld [vmem:[#allocation11 + $0x204] sm:$0xf]
    %v1006 = vld [vmem:[#allocation11 + $0x208] sm:$0xff]
    %v1007 = vld [vmem:[#allocation11 + $0x210] sm:$0xff]
    %v1008 = vld [vmem:[#allocation11 + $0x218] sm:$0xf]
    %v1009 = vld [vmem:[#allocation11 + $0x21c] sm:$0xff]
    %v1010 = vld [vmem:[#allocation11 + $0x224] sm:$0xff]
    %v1011 = vld [vmem:[#allocation11 + $0x22c] sm:$0xf]
    %v1012 = vld [vmem:[#allocation11 + $0x230] sm:$0xff]
    %v1013 = vld [vmem:[#allocation11 + $0x238] sm:$0xff]
    %v1014 = vld [vmem:[#allocation11 + $0x240] sm:$0xf]
    %v1015 = vld [vmem:[#allocation11 + $0x244] sm:$0xff]
    %v1016 = vld [vmem:[#allocation11 + $0x24c] sm:$0xff]
    %v1017 = vld [vmem:[#allocation11 + $0x254] sm:$0xf]
    %v1018 = vld [vmem:[#allocation11 + $0x258] sm:$0xff]
    %v1019 = vld [vmem:[#allocation11 + $0x260] sm:$0xff]
    %v1020 = vld [vmem:[#allocation11 + $0x268] sm:$0xf]
    %v1021 = vld [vmem:[#allocation11 + $0x26c] sm:$0xff]
    %v1022 = vld [vmem:[#allocation11 + $0x274] sm:$0xff]
    %v1023 = vld [vmem:[#allocation11 + $0x27c] sm:$0xf]
    %v1024 = vld [vmem:[#allocation11 + $0x280] sm:$0xff]
    %v1025 = vld [vmem:[#allocation11 + $0x288] sm:$0xff]
    %v1026 = vld [vmem:[#allocation11 + $0x290] sm:$0xf]
    %v1027 = vld [vmem:[#allocation11 + $0x294] sm:$0xff]
    %v1028 = vld [vmem:[#allocation11 + $0x29c] sm:$0xff]
    %v1029 = vld [vmem:[#allocation11 + $0x2a4] sm:$0xf]
    %v1030 = vld [vmem:[#allocation11 + $0x2a8] sm:$0xff]
    %v1031 = vld [vmem:[#allocation11 + $0x2b0] sm:$0xff]
    %v1032 = vld [vmem:[#allocation11 + $0x2b8] sm:$0xf]
    %v1033 = vld [vmem:[#allocation11 + $0x2bc] sm:$0xff]
    %v1034 = vld [vmem:[#allocation11 + $0x2c4] sm:$0xff]
    %v1035 = vld [vmem:[#allocation11 + $0x2cc] sm:$0xf]
    %v1036 = vld [vmem:[#allocation11 + $0x2d0] sm:$0xff]
    %v1037 = vld [vmem:[#allocation11 + $0x2d8] sm:$0xff]
    %v1038 = vld [vmem:[#allocation11 + $0x2e0] sm:$0xf]
    %v1039 = vld [vmem:[#allocation11 + $0x2e4] sm:$0xff]
    %v1040 = vld [vmem:[#allocation11 + $0x2ec] sm:$0xff]
    %v1041 = vld [vmem:[#allocation11 + $0x2f4] sm:$0xf]
    %v1042 = vld [vmem:[#allocation11 + $0x2f8] sm:$0xff]
    %v1043 = vld [vmem:[#allocation11 + $0x300] sm:$0xff]
    %v1044 = vld [vmem:[#allocation11 + $0x308] sm:$0xf]
    %v1045 = vld [vmem:[#allocation11 + $0x30c] sm:$0xff]
    %v1046 = vld [vmem:[#allocation11 + $0x314] sm:$0xff]
    %v1047 = vld [vmem:[#allocation11 + $0x31c] sm:$0xf]
    %v1048 = vld [vmem:[#allocation11 + $0x320] sm:$0xff]
    %v1049 = vld [vmem:[#allocation11 + $0x328] sm:$0xff]
    %v1050 = vld [vmem:[#allocation11 + $0x330] sm:$0xf]
    %v1051 = vld [vmem:[#allocation11 + $0x334] sm:$0xff]
    %v1052 = vld [vmem:[#allocation11 + $0x33c] sm:$0xff]
    %v1053 = vld [vmem:[#allocation11 + $0x344] sm:$0xf]
    %v1054 = vld [vmem:[#allocation11 + $0x348] sm:$0xff]
    %v1055 = vld [vmem:[#allocation11 + $0x350] sm:$0xff]
    %v1056 = vld [vmem:[#allocation11 + $0x358] sm:$0xf]
    %v1057 = vld [vmem:[#allocation11 + $0x35c] sm:$0xff]
    %v1058 = vld [vmem:[#allocation11 + $0x364] sm:$0xff]
    %v1059 = vld [vmem:[#allocation11 + $0x36c] sm:$0xf]
    %v1060 = vld [vmem:[#allocation11 + $0x370] sm:$0xff]
    %v1061 = vld [vmem:[#allocation11 + $0x378] sm:$0xff]
    %v1062 = vld [vmem:[#allocation11 + $0x380] sm:$0xf]
    %v1063 = vld [vmem:[#allocation11 + $0x384] sm:$0xff]
    %v1064 = vld [vmem:[#allocation11 + $0x38c] sm:$0xff]
    %v1065 = vld [vmem:[#allocation11 + $0x394] sm:$0xf]
    %v1066 = vld [vmem:[#allocation11 + $0x398] sm:$0xff]
    %v1067 = vld [vmem:[#allocation11 + $0x3a0] sm:$0xff]
    %v1068 = vld [vmem:[#allocation11 + $0x3a8] sm:$0xf]
    %v1069 = vld [vmem:[#allocation11 + $0x3ac] sm:$0xff]
    %v1070 = vld [vmem:[#allocation11 + $0x3b4] sm:$0xff]
    %v1071 = vld [vmem:[#allocation11 + $0x3bc] sm:$0xf]
    %v1072 = vld [vmem:[%s7 + $0x7] sm:$0x1f]
    %v1074 = vlaneseq
    %v1075 = vshrl.u32 %v1074, 7
    %v1076 = vsub.s32 0, %v1075
    %v1077 = vrot.slane %v1072, %v1076
    %v1078 = vlaneseq
    %v1079 = vshrl.u32 %v1078, 7
    %v1080 = vsub.s32 1, %v1079
    %v1081 = vrot.slane %v1072, %v1080
    %v1082 = vlaneseq
    %v1083 = vshrl.u32 %v1082, 7
    %v1084 = vsub.s32 2, %v1083
    %v1085 = vrot.slane %v1072, %v1084
    %v1086 = vlaneseq
    %v1087 = vshrl.u32 %v1086, 7
    %v1088 = vsub.s32 3, %v1087
    %v1089 = vrot.slane %v1072, %v1088
    %v1090 = vlaneseq
    %v1091 = vshrl.u32 %v1090, 7
    %v1092 = vsub.s32 4, %v1091
    %v1093 = vrot.slane %v1072, %v1092
    %v1243 = vunpack.c.l.b16 %v928
    %v1244 = vunpack.c.h.b16 %v928
    %v1245 = vunpack.c.l.b16 %v929
    %v1246 = vunpack.c.h.b16 %v929
    %v1247 = vunpack.c.l.b16 %v930
    %v1248 = vunpack.c.l.b16 %v931
    %v1249 = vunpack.c.h.b16 %v931
    %v1250 = vunpack.c.l.b16 %v932
    %v1251 = vunpack.c.h.b16 %v932
    %v1252 = vunpack.c.l.b16 %v933
    %v1253 = vunpack.c.l.b16 %v934
    %v1254 = vunpack.c.h.b16 %v934
    %v1255 = vunpack.c.l.b16 %v935
    %v1256 = vunpack.c.h.b16 %v935
    %v1257 = vunpack.c.l.b16 %v936
    %v1258 = vunpack.c.l.b16 %v937
    %v1259 = vunpack.c.h.b16 %v937
    %v1260 = vunpack.c.l.b16 %v938
    %v1261 = vunpack.c.h.b16 %v938
    %v1262 = vunpack.c.l.b16 %v939
    %v1263 = vunpack.c.l.b16 %v940
    %v1264 = vunpack.c.h.b16 %v940
    %v1265 = vunpack.c.l.b16 %v941
    %v1266 = vunpack.c.h.b16 %v941
    %v1267 = vunpack.c.l.b16 %v942
    %v1268 = vunpack.c.l.b16 %v943
    %v1269 = vunpack.c.h.b16 %v943
    %v1270 = vunpack.c.l.b16 %v944
    %v1271 = vunpack.c.h.b16 %v944
    %v1272 = vunpack.c.l.b16 %v945
    %v1273 = vunpack.c.l.b16 %v946
    %v1274 = vunpack.c.h.b16 %v946
    %v1275 = vunpack.c.l.b16 %v947
    %v1276 = vunpack.c.h.b16 %v947
    %v1277 = vunpack.c.l.b16 %v948
    %v1278 = vunpack.c.l.b16 %v949
    %v1279 = vunpack.c.h.b16 %v949
    %v1280 = vunpack.c.l.b16 %v950
    %v1281 = vunpack.c.h.b16 %v950
    %v1282 = vunpack.c.l.b16 %v951
    %v1283 = vunpack.c.l.b16 %v952
    %v1284 = vunpack.c.h.b16 %v952
    %v1285 = vunpack.c.l.b16 %v953
    %v1286 = vunpack.c.h.b16 %v953
    %v1287 = vunpack.c.l.b16 %v954
    %v1288 = vunpack.c.l.b16 %v955
    %v1289 = vunpack.c.h.b16 %v955
    %v1290 = vunpack.c.l.b16 %v956
    %v1291 = vunpack.c.h.b16 %v956
    %v1292 = vunpack.c.l.b16 %v957
    %v1293 = vunpack.c.l.b16 %v958
    %v1294 = vunpack.c.h.b16 %v958
    %v1295 = vunpack.c.l.b16 %v959
    %v1296 = vunpack.c.h.b16 %v959
    %v1297 = vunpack.c.l.b16 %v960
    %v1298 = vunpack.c.l.b16 %v961
    %v1299 = vunpack.c.h.b16 %v961
    %v1300 = vunpack.c.l.b16 %v962
    %v1301 = vunpack.c.h.b16 %v962
    %v1302 = vunpack.c.l.b16 %v963
    %v1303 = vunpack.c.l.b16 %v964
    %v1304 = vunpack.c.h.b16 %v964
    %v1305 = vunpack.c.l.b16 %v965
    %v1306 = vunpack.c.h.b16 %v965
    %v1307 = vunpack.c.l.b16 %v966
    %v1308 = vunpack.c.l.b16 %v967
    %v1309 = vunpack.c.h.b16 %v967
    %v1310 = vunpack.c.l.b16 %v968
    %v1311 = vunpack.c.h.b16 %v968
    %v1312 = vunpack.c.l.b16 %v969
    %v1313 = vunpack.c.l.b16 %v970
    %v1314 = vunpack.c.h.b16 %v970
    %v1315 = vunpack.c.l.b16 %v971
    %v1316 = vunpack.c.h.b16 %v971
    %v1317 = vunpack.c.l.b16 %v972
    %v1318 = vunpack.c.l.b16 %v973
    %v1319 = vunpack.c.h.b16 %v973
    %v1320 = vunpack.c.l.b16 %v974
    %v1321 = vunpack.c.h.b16 %v974
    %v1322 = vunpack.c.l.b16 %v975
    %v1323 = vunpack.c.l.b16 %v976
    %v1324 = vunpack.c.h.b16 %v976
    %v1325 = vunpack.c.l.b16 %v977
    %v1326 = vunpack.c.h.b16 %v977
    %v1327 = vunpack.c.l.b16 %v978
    %v1328 = vunpack.c.l.b16 %v979
    %v1329 = vunpack.c.h.b16 %v979
    %v1330 = vunpack.c.l.b16 %v980
    %v1331 = vunpack.c.h.b16 %v980
    %v1332 = vunpack.c.l.b16 %v981
    %v1333 = vunpack.c.l.b16 %v982
    %v1334 = vunpack.c.h.b16 %v982
    %v1335 = vunpack.c.l.b16 %v983
    %v1336 = vunpack.c.h.b16 %v983
    %v1337 = vunpack.c.l.b16 %v984
    %v1338 = vunpack.c.l.b16 %v985
    %v1339 = vunpack.c.h.b16 %v985
    %v1340 = vunpack.c.l.b16 %v986
    %v1341 = vunpack.c.h.b16 %v986
    %v1342 = vunpack.c.l.b16 %v987
    %v1343 = vunpack.c.l.b16 %v988
    %v1344 = vunpack.c.h.b16 %v988
    %v1345 = vunpack.c.l.b16 %v989
    %v1346 = vunpack.c.h.b16 %v989
    %v1347 = vunpack.c.l.b16 %v990
    %v1348 = vunpack.c.l.b16 %v991
    %v1349 = vunpack.c.h.b16 %v991
    %v1350 = vunpack.c.l.b16 %v992
    %v1351 = vunpack.c.h.b16 %v992
    %v1352 = vunpack.c.l.b16 %v993
    %v1353 = vunpack.c.l.b16 %v994
    %v1354 = vunpack.c.h.b16 %v994
    %v1355 = vunpack.c.l.b16 %v995
    %v1356 = vunpack.c.h.b16 %v995
    %v1357 = vunpack.c.l.b16 %v996
    %v1358 = vunpack.c.l.b16 %v997
    %v1359 = vunpack.c.h.b16 %v997
    %v1360 = vunpack.c.l.b16 %v998
    %v1361 = vunpack.c.h.b16 %v998
    %v1362 = vunpack.c.l.b16 %v999
    %v1363 = vunpack.c.l.b16 %v1000
    %v1364 = vunpack.c.h.b16 %v1000
    %v1365 = vunpack.c.l.b16 %v1001
    %v1366 = vunpack.c.h.b16 %v1001
    %v1367 = vunpack.c.l.b16 %v1002
    %v1368 = vunpack.c.l.b16 %v1003
    %v1369 = vunpack.c.h.b16 %v1003
    %v1370 = vunpack.c.l.b16 %v1004
    %v1371 = vunpack.c.h.b16 %v1004
    %v1372 = vunpack.c.l.b16 %v1005
    %v1373 = vunpack.c.l.b16 %v1006
    %v1374 = vunpack.c.h.b16 %v1006
    %v1375 = vunpack.c.l.b16 %v1007
    %v1376 = vunpack.c.h.b16 %v1007
    %v1377 = vunpack.c.l.b16 %v1008
    %v1378 = vunpack.c.l.b16 %v1009
    %v1379 = vunpack.c.h.b16 %v1009
    %v1380 = vunpack.c.l.b16 %v1010
    %v1381 = vunpack.c.h.b16 %v1010
    %v1382 = vunpack.c.l.b16 %v1011
    %v1383 = vunpack.c.l.b16 %v1012
    %v1384 = vunpack.c.h.b16 %v1012
    %v1385 = vunpack.c.l.b16 %v1013
    %v1386 = vunpack.c.h.b16 %v1013
    %v1387 = vunpack.c.l.b16 %v1014
    %v1388 = vunpack.c.l.b16 %v1015
    %v1389 = vunpack.c.h.b16 %v1015
    %v1390 = vunpack.c.l.b16 %v1016
    %v1391 = vunpack.c.h.b16 %v1016
    %v1392 = vunpack.c.l.b16 %v1017
    %v1393 = vunpack.c.l.b16 %v1018
    %v1394 = vunpack.c.h.b16 %v1018
    %v1395 = vunpack.c.l.b16 %v1019
    %v1396 = vunpack.c.h.b16 %v1019
    %v1397 = vunpack.c.l.b16 %v1020
    %v1398 = vunpack.c.l.b16 %v1021
    %v1399 = vunpack.c.h.b16 %v1021
    %v1400 = vunpack.c.l.b16 %v1022
    %v1401 = vunpack.c.h.b16 %v1022
    %v1402 = vunpack.c.l.b16 %v1023
    %v1403 = vunpack.c.l.b16 %v1024
    %v1404 = vunpack.c.h.b16 %v1024
    %v1405 = vunpack.c.l.b16 %v1025
    %v1406 = vunpack.c.h.b16 %v1025
    %v1407 = vunpack.c.l.b16 %v1026
    %v1408 = vunpack.c.l.b16 %v1027
    %v1409 = vunpack.c.h.b16 %v1027
    %v1410 = vunpack.c.l.b16 %v1028
    %v1411 = vunpack.c.h.b16 %v1028
    %v1412 = vunpack.c.l.b16 %v1029
    %v1413 = vunpack.c.l.b16 %v1030
    %v1414 = vunpack.c.h.b16 %v1030
    %v1415 = vunpack.c.l.b16 %v1031
    %v1416 = vunpack.c.h.b16 %v1031
    %v1417 = vunpack.c.l.b16 %v1032
    %v1418 = vunpack.c.l.b16 %v1033
    %v1419 = vunpack.c.h.b16 %v1033
    %v1420 = vunpack.c.l.b16 %v1034
    %v1421 = vunpack.c.h.b16 %v1034
    %v1422 = vunpack.c.l.b16 %v1035
    %v1423 = vunpack.c.l.b16 %v1036
    %v1424 = vunpack.c.h.b16 %v1036
    %v1425 = vunpack.c.l.b16 %v1037
    %v1426 = vunpack.c.h.b16 %v1037
    %v1427 = vunpack.c.l.b16 %v1038
    %v1428 = vunpack.c.l.b16 %v1039
    %v1429 = vunpack.c.h.b16 %v1039
    %v1430 = vunpack.c.l.b16 %v1040
    %v1431 = vunpack.c.h.b16 %v1040
    %v1432 = vunpack.c.l.b16 %v1041
    %v1433 = vunpack.c.l.b16 %v1042
    %v1434 = vunpack.c.h.b16 %v1042
    %v1435 = vunpack.c.l.b16 %v1043
    %v1436 = vunpack.c.h.b16 %v1043
    %v1437 = vunpack.c.l.b16 %v1044
    %v1438 = vunpack.c.l.b16 %v1045
    %v1439 = vunpack.c.h.b16 %v1045
    %v1440 = vunpack.c.l.b16 %v1046
    %v1441 = vunpack.c.h.b16 %v1046
    %v1442 = vunpack.c.l.b16 %v1047
    %v1443 = vunpack.c.l.b16 %v1048
    %v1444 = vunpack.c.h.b16 %v1048
    %v1445 = vunpack.c.l.b16 %v1049
    %v1446 = vunpack.c.h.b16 %v1049
    %v1447 = vunpack.c.l.b16 %v1050
    %v1448 = vunpack.c.l.b16 %v1051
    %v1449 = vunpack.c.h.b16 %v1051
    %v1450 = vunpack.c.l.b16 %v1052
    %v1451 = vunpack.c.h.b16 %v1052
    %v1452 = vunpack.c.l.b16 %v1053
    %v1453 = vunpack.c.l.b16 %v1054
    %v1454 = vunpack.c.h.b16 %v1054
    %v1455 = vunpack.c.l.b16 %v1055
    %v1456 = vunpack.c.h.b16 %v1055
    %v1457 = vunpack.c.l.b16 %v1056
    %v1458 = vunpack.c.l.b16 %v1057
    %v1459 = vunpack.c.h.b16 %v1057
    %v1460 = vunpack.c.l.b16 %v1058
    %v1461 = vunpack.c.h.b16 %v1058
    %v1462 = vunpack.c.l.b16 %v1059
    %v1463 = vunpack.c.l.b16 %v1060
    %v1464 = vunpack.c.h.b16 %v1060
    %v1465 = vunpack.c.l.b16 %v1061
    %v1466 = vunpack.c.h.b16 %v1061
    %v1467 = vunpack.c.l.b16 %v1062
    %v1468 = vunpack.c.l.b16 %v1063
    %v1469 = vunpack.c.h.b16 %v1063
    %v1470 = vunpack.c.l.b16 %v1064
    %v1471 = vunpack.c.h.b16 %v1064
    %v1472 = vunpack.c.l.b16 %v1065
    %v1473 = vunpack.c.l.b16 %v1066
    %v1474 = vunpack.c.h.b16 %v1066
    %v1475 = vunpack.c.l.b16 %v1067
    %v1476 = vunpack.c.h.b16 %v1067
    %v1477 = vunpack.c.l.b16 %v1068
    %v1478 = vunpack.c.l.b16 %v1069
    %v1479 = vunpack.c.h.b16 %v1069
    %v1480 = vunpack.c.l.b16 %v1070
    %v1481 = vunpack.c.h.b16 %v1070
    %v1482 = vunpack.c.l.b16 %v1071
    %v1483 = vpack.c.b16 %v1248, %v1243
    %v1484 = vpack.c.b16 %v1249, %v1244
    %v1485 = vpack.c.b16 %v1250, %v1245
    %v1486 = vpack.c.b16 %v1251, %v1246
    %v1487 = vpack.c.b16 %v1252, %v1247
    %v1488 = vpack.c.b16 %v1258, %v1253
    %v1489 = vpack.c.b16 %v1259, %v1254
    %v1490 = vpack.c.b16 %v1260, %v1255
    %v1491 = vpack.c.b16 %v1261, %v1256
    %v1492 = vpack.c.b16 %v1262, %v1257
    %v1493 = vpack.c.b16 %v1268, %v1263
    %v1494 = vpack.c.b16 %v1269, %v1264
    %v1495 = vpack.c.b16 %v1270, %v1265
    %v1496 = vpack.c.b16 %v1271, %v1266
    %v1497 = vpack.c.b16 %v1272, %v1267
    %v1498 = vpack.c.b16 %v1278, %v1273
    %v1499 = vpack.c.b16 %v1279, %v1274
    %v1500 = vpack.c.b16 %v1280, %v1275
    %v1501 = vpack.c.b16 %v1281, %v1276
    %v1502 = vpack.c.b16 %v1282, %v1277
    %v1503 = vpack.c.b16 %v1288, %v1283
    %v1504 = vpack.c.b16 %v1289, %v1284
    %v1505 = vpack.c.b16 %v1290, %v1285
    %v1506 = vpack.c.b16 %v1291, %v1286
    %v1507 = vpack.c.b16 %v1292, %v1287
    %v1508 = vpack.c.b16 %v1298, %v1293
    %v1509 = vpack.c.b16 %v1299, %v1294
    %v1510 = vpack.c.b16 %v1300, %v1295
    %v1511 = vpack.c.b16 %v1301, %v1296
    %v1512 = vpack.c.b16 %v1302, %v1297
    %v1513 = vpack.c.b16 %v1308, %v1303
    %v1514 = vpack.c.b16 %v1309, %v1304
    %v1515 = vpack.c.b16 %v1310, %v1305
    %v1516 = vpack.c.b16 %v1311, %v1306
    %v1517 = vpack.c.b16 %v1312, %v1307
    %v1518 = vpack.c.b16 %v1318, %v1313
    %v1519 = vpack.c.b16 %v1319, %v1314
    %v1520 = vpack.c.b16 %v1320, %v1315
    %v1521 = vpack.c.b16 %v1321, %v1316
    %v1522 = vpack.c.b16 %v1322, %v1317
    %v1523 = vpack.c.b16 %v1328, %v1323
    %v1524 = vpack.c.b16 %v1329, %v1324
    %v1525 = vpack.c.b16 %v1330, %v1325
    %v1526 = vpack.c.b16 %v1331, %v1326
    %v1527 = vpack.c.b16 %v1332, %v1327
    %v1528 = vpack.c.b16 %v1338, %v1333
    %v1529 = vpack.c.b16 %v1339, %v1334
    %v1530 = vpack.c.b16 %v1340, %v1335
    %v1531 = vpack.c.b16 %v1341, %v1336
    %v1532 = vpack.c.b16 %v1342, %v1337
    %v1533 = vpack.c.b16 %v1348, %v1343
    %v1534 = vpack.c.b16 %v1349, %v1344
    %v1535 = vpack.c.b16 %v1350, %v1345
    %v1536 = vpack.c.b16 %v1351, %v1346
    %v1537 = vpack.c.b16 %v1352, %v1347
    %v1538 = vpack.c.b16 %v1358, %v1353
    %v1539 = vpack.c.b16 %v1359, %v1354
    %v1540 = vpack.c.b16 %v1360, %v1355
    %v1541 = vpack.c.b16 %v1361, %v1356
    %v1542 = vpack.c.b16 %v1362, %v1357
    %v1543 = vpack.c.b16 %v1368, %v1363
    %v1544 = vpack.c.b16 %v1369, %v1364
    %v1545 = vpack.c.b16 %v1370, %v1365
    %v1546 = vpack.c.b16 %v1371, %v1366
    %v1547 = vpack.c.b16 %v1372, %v1367
    %v1548 = vpack.c.b16 %v1378, %v1373
    %v1549 = vpack.c.b16 %v1379, %v1374
    %v1550 = vpack.c.b16 %v1380, %v1375
    %v1551 = vpack.c.b16 %v1381, %v1376
    %v1552 = vpack.c.b16 %v1382, %v1377
    %v1553 = vpack.c.b16 %v1388, %v1383
    %v1554 = vpack.c.b16 %v1389, %v1384
    %v1555 = vpack.c.b16 %v1390, %v1385
    %v1556 = vpack.c.b16 %v1391, %v1386
    %v1557 = vpack.c.b16 %v1392, %v1387
    %v1558 = vpack.c.b16 %v1398, %v1393
    %v1559 = vpack.c.b16 %v1399, %v1394
    %v1560 = vpack.c.b16 %v1400, %v1395
    %v1561 = vpack.c.b16 %v1401, %v1396
    %v1562 = vpack.c.b16 %v1402, %v1397
    %v1563 = vpack.c.b16 %v1408, %v1403
    %v1564 = vpack.c.b16 %v1409, %v1404
    %v1565 = vpack.c.b16 %v1410, %v1405
    %v1566 = vpack.c.b16 %v1411, %v1406
    %v1567 = vpack.c.b16 %v1412, %v1407
    %v1568 = vpack.c.b16 %v1418, %v1413
    %v1569 = vpack.c.b16 %v1419, %v1414
    %v1570 = vpack.c.b16 %v1420, %v1415
    %v1571 = vpack.c.b16 %v1421, %v1416
    %v1572 = vpack.c.b16 %v1422, %v1417
    %v1573 = vpack.c.b16 %v1428, %v1423
    %v1574 = vpack.c.b16 %v1429, %v1424
    %v1575 = vpack.c.b16 %v1430, %v1425
    %v1576 = vpack.c.b16 %v1431, %v1426
    %v1577 = vpack.c.b16 %v1432, %v1427
    %v1578 = vpack.c.b16 %v1438, %v1433
    %v1579 = vpack.c.b16 %v1439, %v1434
    %v1580 = vpack.c.b16 %v1440, %v1435
    %v1581 = vpack.c.b16 %v1441, %v1436
    %v1582 = vpack.c.b16 %v1442, %v1437
    %v1583 = vpack.c.b16 %v1448, %v1443
    %v1584 = vpack.c.b16 %v1449, %v1444
    %v1585 = vpack.c.b16 %v1450, %v1445
    %v1586 = vpack.c.b16 %v1451, %v1446
    %v1587 = vpack.c.b16 %v1452, %v1447
    %v1588 = vpack.c.b16 %v1458, %v1453
    %v1589 = vpack.c.b16 %v1459, %v1454
    %v1590 = vpack.c.b16 %v1460, %v1455
    %v1591 = vpack.c.b16 %v1461, %v1456
    %v1592 = vpack.c.b16 %v1462, %v1457
    %v1593 = vpack.c.b16 %v1468, %v1463
    %v1594 = vpack.c.b16 %v1469, %v1464
    %v1595 = vpack.c.b16 %v1470, %v1465
    %v1596 = vpack.c.b16 %v1471, %v1466
    %v1597 = vpack.c.b16 %v1472, %v1467
    %v1598 = vpack.c.b16 %v1478, %v1473
    %v1599 = vpack.c.b16 %v1479, %v1474
    %v1600 = vpack.c.b16 %v1480, %v1475
    %v1601 = vpack.c.b16 %v1481, %v1476
    %v1602 = vpack.c.b16 %v1482, %v1477
    %1723 = vmatprep.subr.bf16.mxu0 %v1484
    %1724 = vmatpush1.bf16.msra.mxu0 %v1483
    %1725 = vmatprep.subr.bf16.mxu0 %v1489
    %1726 = vmatpush1.bf16.msra.mxu0 %v1488
    %1727 = vmatprep.subr.bf16.mxu0 %v1494
    %1728 = vmatpush1.bf16.msra.mxu0 %v1493
    %1729 = vmatprep.subr.bf16.mxu0 %v1499
    %1730 = vmatpush1.bf16.msra.mxu0 %v1498
    %1731 = vmatprep.subr.bf16.mxu0 %v1504
    %1732 = vmatpush1.bf16.msra.mxu0 %v1503
    %1733 = vmatprep.subr.bf16.mxu0 %v1509
    %1734 = vmatpush1.bf16.msra.mxu0 %v1508
    %1735 = vmatprep.subr.bf16.mxu0 %v1514
    %1736 = vmatpush1.bf16.msra.mxu0 %v1513
    %1737 = vmatprep.subr.bf16.mxu0 %v1519
    %1738 = vmatpush1.bf16.msra.mxu0 %v1518
    %1739 = vmatprep.subr.bf16.mxu0 %v1524
    %1740 = vmatpush1.bf16.msra.mxu0 %v1523
    %1741 = vmatprep.subr.bf16.mxu0 %v1529
    %1742 = vmatpush1.bf16.msra.mxu0 %v1528
    %1743 = vmatprep.subr.bf16.mxu0 %v1534
    %1744 = vmatpush1.bf16.msra.mxu0 %v1533
    %1745 = vmatprep.subr.bf16.mxu0 %v1539
    %1746 = vmatpush1.bf16.msra.mxu0 %v1538
    %1747 = vmatprep.subr.bf16.mxu0 %v1544
    %1748 = vmatpush1.bf16.msra.mxu0 %v1543
    %1749 = vmatprep.subr.bf16.mxu0 %v1549
    %1750 = vmatpush1.bf16.msra.mxu0 %v1548
    %1751 = vmatprep.subr.bf16.mxu0 %v1554
    %1752 = vmatpush1.bf16.msra.mxu0 %v1553
    %1753 = vmatprep.subr.bf16.mxu0 %v1559
    %1754 = vmatpush1.bf16.msra.mxu0 %v1558
    %1755 = vmatprep.mubr.bf16.mxu0 %v926
    %1756 = vmatmul.mubr.bf16.gmra.mrb[0].mxu0 %v925
    %v1757 = vpop.f32.mrb[0].mxu0
    %v1758 = vadd.f32 %v1077, %v1757
    %v1759 = vpop.f32.mrb[0].mxu0
    %v1760 = vadd.f32 %v1081, %v1759
    %v1761 = vpop.f32.mrb[0].mxu0
    %v1762 = vpop.f32.mrb[0].mxu0
    %1763 = vdwg.mxu0
    %1764 = vmatprep.subr.bf16.mxu0 %v1564
    %1765 = vmatpush1.bf16.msra.mxu0 %v1563
    %1766 = vmatprep.subr.bf16.mxu0 %v1569
    %1767 = vmatpush1.bf16.msra.mxu0 %v1568
    %1768 = vmatprep.subr.bf16.mxu0 %v1574
    %1769 = vmatpush1.bf16.msra.mxu0 %v1573
    %1770 = vmatprep.subr.bf16.mxu0 %v1579
    %1771 = vmatpush1.bf16.msra.mxu0 %v1578
    %1772 = vmatprep.subr.bf16.mxu0 %v1584
    %1773 = vmatpush1.bf16.msra.mxu0 %v1583
    %1774 = vmatprep.subr.bf16.mxu0 %v1589
    %1775 = vmatpush1.bf16.msra.mxu0 %v1588
    %1776 = vmatprep.subr.bf16.mxu0 %v1594
    %1777 = vmatpush1.bf16.msra.mxu0 %v1593
    %1778 = vmatprep.subr.bf16.mxu0 %v1599
    %1779 = vmatpush1.bf16.msra.mxu0 %v1598
    %1780 = vmatprep.subr.bf16.mxu0 0
    %1781 = vmatpush1.bf16.msra.mxu0 0
    %1782 = vmatprep.subr.bf16.mxu0 0
    %1783 = vmatpush1.bf16.msra.mxu0 0
    %1784 = vmatprep.subr.bf16.mxu0 0
    %1785 = vmatpush1.bf16.msra.mxu0 0
    %1786 = vmatprep.subr.bf16.mxu0 0
    %1787 = vmatpush1.bf16.msra.mxu0 0
    %1788 = vmatprep.subr.bf16.mxu0 0
    %1789 = vmatpush1.bf16.msra.mxu0 0
    %1790 = vmatprep.subr.bf16.mxu0 0
    %1791 = vmatpush1.bf16.msra.mxu0 0
    %1792 = vmatprep.subr.bf16.mxu0 0
    %1793 = vmatpush1.bf16.msra.mxu0 0
    %1794 = vmatprep.subr.bf16.mxu0 0
    %1795 = vmatpush1.bf16.msra.mxu0 0
    %1796 = vmatprep.mubr.bf16.mxu0 0
    %1797 = vmatmul.mubr.bf16.gmra.mrb[0].mxu0 %v927
    %v1798 = vpop.f32.mrb[0].mxu0
    %v1799 = vadd.f32 %v1758, %v1798
    %v1800 = vpop.f32.mrb[0].mxu0
    %v1801 = vadd.f32 %v1760, %v1800
    %v1802 = vpop.f32.mrb[0].mxu0
    %v1803 = vpop.f32.mrb[0].mxu0
    %1804 = vdwg.mxu0
    %1805 = vmatprep.subr.bf16.mxu0 %v1486
    %1806 = vmatpush1.bf16.msra.mxu0 %v1485
    %1807 = vmatprep.subr.bf16.mxu0 %v1491
    %1808 = vmatpush1.bf16.msra.mxu0 %v1490
    %1809 = vmatprep.subr.bf16.mxu0 %v1496
    %1810 = vmatpush1.bf16.msra.mxu0 %v1495
    %1811 = vmatprep.subr.bf16.mxu0 %v1501
    %1812 = vmatpush1.bf16.msra.mxu0 %v1500
    %1813 = vmatprep.subr.bf16.mxu0 %v1506
    %1814 = vmatpush1.bf16.msra.mxu0 %v1505
    %1815 = vmatprep.subr.bf16.mxu0 %v1511
    %1816 = vmatpush1.bf16.msra.mxu0 %v1510
    %1817 = vmatprep.subr.bf16.mxu0 %v1516
    %1818 = vmatpush1.bf16.msra.mxu0 %v1515
    %1819 = vmatprep.subr.bf16.mxu0 %v1521
    %1820 = vmatpush1.bf16.msra.mxu0 %v1520
    %1821 = vmatprep.subr.bf16.mxu0 %v1526
    %1822 = vmatpush1.bf16.msra.mxu0 %v1525
    %1823 = vmatprep.subr.bf16.mxu0 %v1531
    %1824 = vmatpush1.bf16.msra.mxu0 %v1530
    %1825 = vmatprep.subr.bf16.mxu0 %v1536
    %1826 = vmatpush1.bf16.msra.mxu0 %v1535
    %1827 = vmatprep.subr.bf16.mxu0 %v1541
    %1828 = vmatpush1.bf16.msra.mxu0 %v1540
    %1829 = vmatprep.subr.bf16.mxu0 %v1546
    %1830 = vmatpush1.bf16.msra.mxu0 %v1545
    %1831 = vmatprep.subr.bf16.mxu0 %v1551
    %1832 = vmatpush1.bf16.msra.mxu0 %v1550
    %1833 = vmatprep.subr.bf16.mxu0 %v1556
    %1834 = vmatpush1.bf16.msra.mxu0 %v1555
    %1835 = vmatprep.subr.bf16.mxu0 %v1561
    %1836 = vmatpush1.bf16.msra.mxu0 %v1560
    %1837 = vmatprep.mubr.bf16.mxu0 %v926
    %1838 = vmatmul.mubr.bf16.gmra.mrb[0].mxu0 %v925
    %v1839 = vpop.f32.mrb[0].mxu0
    %v1840 = vadd.f32 %v1085, %v1839
    %v1841 = vpop.f32.mrb[0].mxu0
    %v1842 = vadd.f32 %v1089, %v1841
    %v1843 = vpop.f32.mrb[0].mxu0
    %v1844 = vpop.f32.mrb[0].mxu0
    %1845 = vdwg.mxu0
    %1846 = vmatprep.subr.bf16.mxu0 %v1566
    %1847 = vmatpush1.bf16.msra.mxu0 %v1565
    %1848 = vmatprep.subr.bf16.mxu0 %v1571
    %1849 = vmatpush1.bf16.msra.mxu0 %v1570
    %1850 = vmatprep.subr.bf16.mxu0 %v1576
    %1851 = vmatpush1.bf16.msra.mxu0 %v1575
    %1852 = vmatprep.subr.bf16.mxu0 %v1581
    %1853 = vmatpush1.bf16.msra.mxu0 %v1580
    %1854 = vmatprep.subr.bf16.mxu0 %v1586
    %1855 = vmatpush1.bf16.msra.mxu0 %v1585
    %1856 = vmatprep.subr.bf16.mxu0 %v1591
    %1857 = vmatpush1.bf16.msra.mxu0 %v1590
    %1858 = vmatprep.subr.bf16.mxu0 %v1596
    %1859 = vmatpush1.bf16.msra.mxu0 %v1595
    %1860 = vmatprep.subr.bf16.mxu0 %v1601
    %1861 = vmatpush1.bf16.msra.mxu0 %v1600
    %1862 = vmatprep.subr.bf16.mxu0 0
    %1863 = vmatpush1.bf16.msra.mxu0 0
    %1864 = vmatprep.subr.bf16.mxu0 0
    %1865 = vmatpush1.bf16.msra.mxu0 0
    %1866 = vmatprep.subr.bf16.mxu0 0
    %1867 = vmatpush1.bf16.msra.mxu0 0
    %1868 = vmatprep.subr.bf16.mxu0 0
    %1869 = vmatpush1.bf16.msra.mxu0 0
    %1870 = vmatprep.subr.bf16.mxu0 0
    %1871 = vmatpush1.bf16.msra.mxu0 0
    %1872 = vmatprep.subr.bf16.mxu0 0
    %1873 = vmatpush1.bf16.msra.mxu0 0
    %1874 = vmatprep.subr.bf16.mxu0 0
    %1875 = vmatpush1.bf16.msra.mxu0 0
    %1876 = vmatprep.subr.bf16.mxu0 0
    %1877 = vmatpush1.bf16.msra.mxu0 0
    %1878 = vmatprep.mubr.bf16.mxu0 0
    %1879 = vmatmul.mubr.bf16.gmra.mrb[0].mxu0 %v927
    %v1880 = vpop.f32.mrb[0].mxu0
    %v1881 = vadd.f32 %v1840, %v1880
    %v1882 = vpop.f32.mrb[0].mxu0
    %v1883 = vadd.f32 %v1842, %v1882
    %v1884 = vpop.f32.mrb[0].mxu0
    %v1885 = vpop.f32.mrb[0].mxu0
    %1886 = vdwg.mxu0
    %1887 = vmatprep.subr.bf16.mxu0 0
    %1888 = vmatpush1.bf16.msra.mxu0 %v1487
    %1889 = vmatprep.subr.bf16.mxu0 0
    %1890 = vmatpush1.bf16.msra.mxu0 %v1492
    %1891 = vmatprep.subr.bf16.mxu0 0
    %1892 = vmatpush1.bf16.msra.mxu0 %v1497
    %1893 = vmatprep.subr.bf16.mxu0 0
    %1894 = vmatpush1.bf16.msra.mxu0 %v1502
    %1895 = vmatprep.subr.bf16.mxu0 0
    %1896 = vmatpush1.bf16.msra.mxu0 %v1507
    %1897 = vmatprep.subr.bf16.mxu0 0
    %1898 = vmatpush1.bf16.msra.mxu0 %v1512
    %1899 = vmatprep.subr.bf16.mxu0 0
    %1900 = vmatpush1.bf16.msra.mxu0 %v1517
    %1901 = vmatprep.subr.bf16.mxu0 0
    %1902 = vmatpush1.bf16.msra.mxu0 %v1522
    %1903 = vmatprep.subr.bf16.mxu0 0
    %1904 = vmatpush1.bf16.msra.mxu0 %v1527
    %1905 = vmatprep.subr.bf16.mxu0 0
    %1906 = vmatpush1.bf16.msra.mxu0 %v1532
    %1907 = vmatprep.subr.bf16.mxu0 0
    %1908 = vmatpush1.bf16.msra.mxu0 %v1537
    %1909 = vmatprep.subr.bf16.mxu0 0
    %1910 = vmatpush1.bf16.msra.mxu0 %v1542
    %1911 = vmatprep.subr.bf16.mxu0 0
    %1912 = vmatpush1.bf16.msra.mxu0 %v1547
    %1913 = vmatprep.subr.bf16.mxu0 0
    %1914 = vmatpush1.bf16.msra.mxu0 %v1552
    %1915 = vmatprep.subr.bf16.mxu0 0
    %1916 = vmatpush1.bf16.msra.mxu0 %v1557
    %1917 = vmatprep.subr.bf16.mxu0 0
    %1918 = vmatpush1.bf16.msra.mxu0 %v1562
    %1919 = vmatprep.mubr.bf16.mxu0 %v926
    %1920 = vmatmul.mubr.bf16.gmra.mrb[0].mxu0 %v925
    %v1921 = vpop.f32.mrb[0].mxu0
    %v1922 = vadd.f32 %v1093, %v1921
    %v1923 = vpop.f32.mrb[0].mxu0
    %v1924 = vpop.f32.mrb[0].mxu0
    %v1925 = vpop.f32.mrb[0].mxu0
    %1926 = vdwg.mxu0
    %1927 = vmatprep.subr.bf16.mxu0 0
    %1928 = vmatpush1.bf16.msra.mxu0 %v1567
    %1929 = vmatprep.subr.bf16.mxu0 0
    %1930 = vmatpush1.bf16.msra.mxu0 %v1572
    %1931 = vmatprep.subr.bf16.mxu0 0
    %1932 = vmatpush1.bf16.msra.mxu0 %v1577
    %1933 = vmatprep.subr.bf16.mxu0 0
    %1934 = vmatpush1.bf16.msra.mxu0 %v1582
    %1935 = vmatprep.subr.bf16.mxu0 0
    %1936 = vmatpush1.bf16.msra.mxu0 %v1587
    %1937 = vmatprep.subr.bf16.mxu0 0
    %1938 = vmatpush1.bf16.msra.mxu0 %v1592
    %1939 = vmatprep.subr.bf16.mxu0 0
    %1940 = vmatpush1.bf16.msra.mxu0 %v1597
    %1941 = vmatprep.subr.bf16.mxu0 0
    %1942 = vmatpush1.bf16.msra.mxu0 %v1602
    %1943 = vmatprep.subr.bf16.mxu0 0
    %1944 = vmatpush1.bf16.msra.mxu0 0
    %1945 = vmatprep.subr.bf16.mxu0 0
    %1946 = vmatpush1.bf16.msra.mxu0 0
    %1947 = vmatprep.subr.bf16.mxu0 0
    %1948 = vmatpush1.bf16.msra.mxu0 0
    %1949 = vmatprep.subr.bf16.mxu0 0
    %1950 = vmatpush1.bf16.msra.mxu0 0
    %1951 = vmatprep.subr.bf16.mxu0 0
    %1952 = vmatpush1.bf16.msra.mxu0 0
    %1953 = vmatprep.subr.bf16.mxu0 0
    %1954 = vmatpush1.bf16.msra.mxu0 0
    %1955 = vmatprep.subr.bf16.mxu0 0
    %1956 = vmatpush1.bf16.msra.mxu0 0
    %1957 = vmatprep.subr.bf16.mxu0 0
    %1958 = vmatpush1.bf16.msra.mxu0 0
    %1959 = vmatprep.mubr.bf16.mxu0 0
    %1960 = vmatmul.mubr.bf16.gmra.mrb[0].mxu0 %v927
    %v1961 = vpop.f32.mrb[0].mxu0
    %v1962 = vadd.f32 %v1922, %v1961
    %v1963 = vpop.f32.mrb[0].mxu0
    %v1964 = vpop.f32.mrb[0].mxu0
    %v1965 = vpop.f32.mrb[0].mxu0
    %1966 = vdwg.mxu0
    %v1967 = vmax.f32 %v1799, 0.0
    %v1968 = vmax.f32 %v1801, 0.0
    %v1969 = vmax.f32 %v1881, 0.0
    %v1970 = vmax.f32 %v1883, 0.0
    %v1971 = vmax.f32 %v1962, 0.0
    %v1972 = vpack.c.bf16 %v1967, %v1967
    %v1973 = vpack.c.bf16 %v1968, %v1968
    %v1974 = vpack.c.bf16 %v1969, %v1969
    %v1975 = vpack.c.bf16 %v1970, %v1970
    %v1976 = vpack.c.bf16 %v1971, %v1971
    %v1977 = vld [vmem:[#allocation13] sm:$0xf]
    %v1978 = vld [vmem:[#allocation13 + $0x4] sm:$0xf]
    %v1979 = vld [vmem:[#allocation13 + $0x8] sm:$0xf]
    %v1980 = vld [vmem:[#allocation13 + $0xc] sm:$0xf]
    %v1981 = vld [vmem:[#allocation13 + $0x10] sm:$0xf]
    %v1982 = vld [vmem:[#allocation13 + $0x14] sm:$0xf]
    %v1983 = vld [vmem:[#allocation13 + $0x18] sm:$0xf]
    %v1984 = vld [vmem:[#allocation13 + $0x1c] sm:$0xf]
    %v1985 = vld [vmem:[#allocation13 + $0x20] sm:$0xf]
    %v1986 = vld [vmem:[#allocation13 + $0x24] sm:$0xf]
    %v1987 = vld [vmem:[#allocation13 + $0x28] sm:$0xf]
    %v1988 = vld [vmem:[#allocation13 + $0x2c] sm:$0xf]
    %v1989 = vld [vmem:[#allocation13 + $0x30] sm:$0xf]
    %v1990 = vld [vmem:[#allocation13 + $0x34] sm:$0xf]
    %v1991 = vld [vmem:[#allocation13 + $0x38] sm:$0xf]
    %v1992 = vld [vmem:[#allocation13 + $0x3c] sm:$0xf]
    %v1993 = vld [vmem:[#allocation13 + $0x40] sm:$0xf]
    %v1994 = vld [vmem:[#allocation13 + $0x44] sm:$0xf]
    %v1995 = vld [vmem:[#allocation13 + $0x48] sm:$0xf]
    %v1996 = vld [vmem:[#allocation13 + $0x4c] sm:$0xf]
    %v1997 = vld [vmem:[#allocation13 + $0x50] sm:$0xf]
    %v1998 = vld [vmem:[#allocation13 + $0x54] sm:$0xf]
    %v1999 = vld [vmem:[#allocation13 + $0x58] sm:$0xf]
    %v2000 = vld [vmem:[#allocation13 + $0x5c] sm:$0xf]
    %v2001 = vld [vmem:[#allocation13 + $0x60] sm:$0xf]
    %v2002 = vld [vmem:[#allocation13 + $0x64] sm:$0xf]
    %v2003 = vld [vmem:[#allocation13 + $0x68] sm:$0xf]
    %v2004 = vld [vmem:[#allocation13 + $0x6c] sm:$0xf]
    %v2005 = vld [vmem:[#allocation13 + $0x70] sm:$0xf]
    %v2006 = vld [vmem:[#allocation13 + $0x74] sm:$0xf]
    %v2007 = vld [vmem:[#allocation13 + $0x78] sm:$0xf]
    %v2008 = vld [vmem:[#allocation13 + $0x7c] sm:$0xf]
    %v2009 = vld [vmem:[#allocation13 + $0x80] sm:$0xf]
    %v2010 = vld [vmem:[#allocation13 + $0x84] sm:$0xf]
    %v2011 = vld [vmem:[#allocation13 + $0x88] sm:$0xf]
    %v2012 = vld [vmem:[#allocation13 + $0x8c] sm:$0xf]
    %v2013 = vld [vmem:[#allocation13 + $0x90] sm:$0xf]
    %v2014 = vld [vmem:[#allocation13 + $0x94] sm:$0xf]
    %v2015 = vld [vmem:[#allocation13 + $0x98] sm:$0xf]
    %v2016 = vld [vmem:[#allocation13 + $0x9c] sm:$0xf]
    %v2017 = vld [vmem:[#allocation13 + $0xa0] sm:$0xf]
    %v2018 = vld [vmem:[#allocation13 + $0xa4] sm:$0xf]
    %v2019 = vld [vmem:[#allocation13 + $0xa8] sm:$0xf]
    %v2020 = vld [vmem:[#allocation13 + $0xac] sm:$0xf]
    %v2021 = vld [vmem:[#allocation13 + $0xb0] sm:$0xf]
    %v2022 = vld [vmem:[#allocation13 + $0xb4] sm:$0xf]
    %v2023 = vld [vmem:[#allocation13 + $0xb8] sm:$0xf]
    %v2024 = vld [vmem:[#allocation13 + $0xbc] sm:$0xf]
    %v2025 = vld [vmem:[#allocation13 + $0xc0] sm:$0xf]
    %v2026 = vld [vmem:[#allocation13 + $0xc4] sm:$0xf]
    %v2027 = vld [vmem:[#allocation13 + $0xc8] sm:$0xf]
    %v2028 = vld [vmem:[#allocation13 + $0xcc] sm:$0xf]
    %v2029 = vld [vmem:[#allocation13 + $0xd0] sm:$0xf]
    %v2030 = vld [vmem:[#allocation13 + $0xd4] sm:$0xf]
    %v2031 = vld [vmem:[#allocation13 + $0xd8] sm:$0xf]
    %v2032 = vld [vmem:[#allocation13 + $0xdc] sm:$0xf]
    %v2033 = vld [vmem:[#allocation13 + $0xe0] sm:$0xf]
    %v2034 = vld [vmem:[#allocation13 + $0xe4] sm:$0xf]
    %v2035 = vld [vmem:[#allocation13 + $0xe8] sm:$0xf]
    %v2036 = vld [vmem:[#allocation13 + $0xec] sm:$0xf]
    %v2037 = vld [vmem:[#allocation13 + $0xf0] sm:$0xf]
    %v2038 = vld [vmem:[#allocation13 + $0xf4] sm:$0xf]
    %v2039 = vld [vmem:[#allocation13 + $0xf8] sm:$0xf]
    %v2040 = vld [vmem:[#allocation13 + $0xfc] sm:$0xf]
    %v2041 = vld [vmem:[#allocation13 + $0x100] sm:$0xf]
    %v2042 = vld [vmem:[#allocation13 + $0x104] sm:$0xf]
    %v2043 = vld [vmem:[#allocation13 + $0x108] sm:$0xf]
    %v2044 = vld [vmem:[#allocation13 + $0x10c] sm:$0xf]
    %v2045 = vld [vmem:[#allocation13 + $0x110] sm:$0xf]
    %v2046 = vld [vmem:[#allocation13 + $0x114] sm:$0xf]
    %v2047 = vld [vmem:[#allocation13 + $0x118] sm:$0xf]
    %v2048 = vld [vmem:[#allocation13 + $0x11c] sm:$0xf]
    %v2049 = vld [vmem:[#allocation13 + $0x120] sm:$0xf]
    %v2050 = vld [vmem:[#allocation13 + $0x124] sm:$0xf]
    %v2051 = vld [vmem:[#allocation13 + $0x128] sm:$0xf]
    %v2052 = vld [vmem:[#allocation13 + $0x12c] sm:$0xf]
    %v2053 = vld [vmem:[#allocation13 + $0x130] sm:$0xf]
    %v2054 = vld [vmem:[#allocation13 + $0x134] sm:$0xf]
    %v2055 = vld [vmem:[#allocation13 + $0x138] sm:$0xf]
    %v2056 = vld [vmem:[#allocation13 + $0x13c] sm:$0xf]
    %v2057 = vld [vmem:[%s7 + $0xc] sm:$0x1]
    %v2059 = vlaneseq
    %v2060 = vshrl.u32 %v2059, 7
    %v2061 = vsub.s32 0, %v2060
    %v2062 = vrot.slane %v2057, %v2061
    %v2144 = vunpack.c.l.b16 %v1977
    %v2145 = vunpack.c.l.b16 %v1978
    %v2146 = vunpack.c.l.b16 %v1979
    %v2147 = vunpack.c.l.b16 %v1980
    %v2148 = vunpack.c.l.b16 %v1981
    %v2149 = vunpack.c.l.b16 %v1982
    %v2150 = vunpack.c.l.b16 %v1983
    %v2151 = vunpack.c.l.b16 %v1984
    %v2152 = vunpack.c.l.b16 %v1985
    %v2153 = vunpack.c.l.b16 %v1986
    %v2154 = vunpack.c.l.b16 %v1987
    %v2155 = vunpack.c.l.b16 %v1988
    %v2156 = vunpack.c.l.b16 %v1989
    %v2157 = vunpack.c.l.b16 %v1990
    %v2158 = vunpack.c.l.b16 %v1991
    %v2159 = vunpack.c.l.b16 %v1992
    %v2160 = vunpack.c.l.b16 %v1993
    %v2161 = vunpack.c.l.b16 %v1994
    %v2162 = vunpack.c.l.b16 %v1995
    %v2163 = vunpack.c.l.b16 %v1996
    %v2164 = vunpack.c.l.b16 %v1997
    %v2165 = vunpack.c.l.b16 %v1998
    %v2166 = vunpack.c.l.b16 %v1999
    %v2167 = vunpack.c.l.b16 %v2000
    %v2168 = vunpack.c.l.b16 %v2001
    %v2169 = vunpack.c.l.b16 %v2002
    %v2170 = vunpack.c.l.b16 %v2003
    %v2171 = vunpack.c.l.b16 %v2004
    %v2172 = vunpack.c.l.b16 %v2005
    %v2173 = vunpack.c.l.b16 %v2006
    %v2174 = vunpack.c.l.b16 %v2007
    %v2175 = vunpack.c.l.b16 %v2008
    %v2176 = vunpack.c.l.b16 %v2009
    %v2177 = vunpack.c.l.b16 %v2010
    %v2178 = vunpack.c.l.b16 %v2011
    %v2179 = vunpack.c.l.b16 %v2012
    %v2180 = vunpack.c.l.b16 %v2013
    %v2181 = vunpack.c.l.b16 %v2014
    %v2182 = vunpack.c.l.b16 %v2015
    %v2183 = vunpack.c.l.b16 %v2016
    %v2184 = vunpack.c.l.b16 %v2017
    %v2185 = vunpack.c.l.b16 %v2018
    %v2186 = vunpack.c.l.b16 %v2019
    %v2187 = vunpack.c.l.b16 %v2020
    %v2188 = vunpack.c.l.b16 %v2021
    %v2189 = vunpack.c.l.b16 %v2022
    %v2190 = vunpack.c.l.b16 %v2023
    %v2191 = vunpack.c.l.b16 %v2024
    %v2192 = vunpack.c.l.b16 %v2025
    %v2193 = vunpack.c.l.b16 %v2026
    %v2194 = vunpack.c.l.b16 %v2027
    %v2195 = vunpack.c.l.b16 %v2028
    %v2196 = vunpack.c.l.b16 %v2029
    %v2197 = vunpack.c.l.b16 %v2030
    %v2198 = vunpack.c.l.b16 %v2031
    %v2199 = vunpack.c.l.b16 %v2032
    %v2200 = vunpack.c.l.b16 %v2033
    %v2201 = vunpack.c.l.b16 %v2034
    %v2202 = vunpack.c.l.b16 %v2035
    %v2203 = vunpack.c.l.b16 %v2036
    %v2204 = vunpack.c.l.b16 %v2037
    %v2205 = vunpack.c.l.b16 %v2038
    %v2206 = vunpack.c.l.b16 %v2039
    %v2207 = vunpack.c.l.b16 %v2040
    %v2208 = vunpack.c.l.b16 %v2041
    %v2209 = vunpack.c.l.b16 %v2042
    %v2210 = vunpack.c.l.b16 %v2043
    %v2211 = vunpack.c.l.b16 %v2044
    %v2212 = vunpack.c.l.b16 %v2045
    %v2213 = vunpack.c.l.b16 %v2046
    %v2214 = vunpack.c.l.b16 %v2047
    %v2215 = vunpack.c.l.b16 %v2048
    %v2216 = vunpack.c.l.b16 %v2049
    %v2217 = vunpack.c.l.b16 %v2050
    %v2218 = vunpack.c.l.b16 %v2051
    %v2219 = vunpack.c.l.b16 %v2052
    %v2220 = vunpack.c.l.b16 %v2053
    %v2221 = vunpack.c.l.b16 %v2054
    %v2222 = vunpack.c.l.b16 %v2055
    %v2223 = vunpack.c.l.b16 %v2056
    %v2224 = vpack.c.b16 %v2145, %v2144
    %v2225 = vpack.c.b16 %v2147, %v2146
    %v2226 = vpack.c.b16 %v2149, %v2148
    %v2227 = vpack.c.b16 %v2151, %v2150
    %v2228 = vpack.c.b16 %v2153, %v2152
    %v2229 = vpack.c.b16 %v2155, %v2154
    %v2230 = vpack.c.b16 %v2157, %v2156
    %v2231 = vpack.c.b16 %v2159, %v2158
    %v2232 = vpack.c.b16 %v2161, %v2160
    %v2233 = vpack.c.b16 %v2163, %v2162
    %v2234 = vpack.c.b16 %v2165, %v2164
    %v2235 = vpack.c.b16 %v2167, %v2166
    %v2236 = vpack.c.b16 %v2169, %v2168
    %v2237 = vpack.c.b16 %v2171, %v2170
    %v2238 = vpack.c.b16 %v2173, %v2172
    %v2239 = vpack.c.b16 %v2175, %v2174
    %v2240 = vpack.c.b16 %v2177, %v2176
    %v2241 = vpack.c.b16 %v2179, %v2178
    %v2242 = vpack.c.b16 %v2181, %v2180
    %v2243 = vpack.c.b16 %v2183, %v2182
    %v2244 = vpack.c.b16 %v2185, %v2184
    %v2245 = vpack.c.b16 %v2187, %v2186
    %v2246 = vpack.c.b16 %v2189, %v2188
    %v2247 = vpack.c.b16 %v2191, %v2190
    %v2248 = vpack.c.b16 %v2193, %v2192
    %v2249 = vpack.c.b16 %v2195, %v2194
    %v2250 = vpack.c.b16 %v2197, %v2196
    %v2251 = vpack.c.b16 %v2199, %v2198
    %v2252 = vpack.c.b16 %v2201, %v2200
    %v2253 = vpack.c.b16 %v2203, %v2202
    %v2254 = vpack.c.b16 %v2205, %v2204
    %v2255 = vpack.c.b16 %v2207, %v2206
    %v2256 = vpack.c.b16 %v2209, %v2208
    %v2257 = vpack.c.b16 %v2211, %v2210
    %v2258 = vpack.c.b16 %v2213, %v2212
    %v2259 = vpack.c.b16 %v2215, %v2214
    %v2260 = vpack.c.b16 %v2217, %v2216
    %v2261 = vpack.c.b16 %v2219, %v2218
    %v2262 = vpack.c.b16 %v2221, %v2220
    %v2263 = vpack.c.b16 %v2223, %v2222
    %2304 = vmatprep.subr.bf16.mxu0 0
    %2305 = vmatpush1.bf16.msra.mxu0 %v2224
    %2306 = vmatprep.subr.bf16.mxu0 0
    %2307 = vmatpush1.bf16.msra.mxu0 %v2225
    %2308 = vmatprep.subr.bf16.mxu0 0
    %2309 = vmatpush1.bf16.msra.mxu0 %v2226
    %2310 = vmatprep.subr.bf16.mxu0 0
    %2311 = vmatpush1.bf16.msra.mxu0 %v2227
    %2312 = vmatprep.subr.bf16.mxu0 0
    %2313 = vmatpush1.bf16.msra.mxu0 %v2228
    %2314 = vmatprep.subr.bf16.mxu0 0
    %2315 = vmatpush1.bf16.msra.mxu0 %v2229
    %2316 = vmatprep.subr.bf16.mxu0 0
    %2317 = vmatpush1.bf16.msra.mxu0 %v2230
    %2318 = vmatprep.subr.bf16.mxu0 0
    %2319 = vmatpush1.bf16.msra.mxu0 %v2231
    %2320 = vmatprep.subr.bf16.mxu0 0
    %2321 = vmatpush1.bf16.msra.mxu0 %v2232
    %2322 = vmatprep.subr.bf16.mxu0 0
    %2323 = vmatpush1.bf16.msra.mxu0 %v2233
    %2324 = vmatprep.subr.bf16.mxu0 0
    %2325 = vmatpush1.bf16.msra.mxu0 %v2234
    %2326 = vmatprep.subr.bf16.mxu0 0
    %2327 = vmatpush1.bf16.msra.mxu0 %v2235
    %2328 = vmatprep.subr.bf16.mxu0 0
    %2329 = vmatpush1.bf16.msra.mxu0 %v2236
    %2330 = vmatprep.subr.bf16.mxu0 0
    %2331 = vmatpush1.bf16.msra.mxu0 %v2237
    %2332 = vmatprep.subr.bf16.mxu0 0
    %2333 = vmatpush1.bf16.msra.mxu0 %v2238
    %2334 = vmatprep.subr.bf16.mxu0 0
    %2335 = vmatpush1.bf16.msra.mxu0 %v2239
    %2336 = vmatprep.mubr.bf16.mxu0 %v1973
    %2337 = vmatmul.mubr.bf16.gmra.mrb[0].mxu0 %v1972
    %v2338 = vpop.f32.mrb[0].mxu0
    %v2339 = vadd.f32 %v2062, %v2338
    %v2340 = vpop.f32.mrb[0].mxu0
    %v2341 = vpop.f32.mrb[0].mxu0
    %v2342 = vpop.f32.mrb[0].mxu0
    %2343 = vdwg.mxu0
    %2344 = vmatprep.subr.bf16.mxu0 0
    %2345 = vmatpush1.bf16.msra.mxu0 %v2240
    %2346 = vmatprep.subr.bf16.mxu0 0
    %2347 = vmatpush1.bf16.msra.mxu0 %v2241
    %2348 = vmatprep.subr.bf16.mxu0 0
    %2349 = vmatpush1.bf16.msra.mxu0 %v2242
    %2350 = vmatprep.subr.bf16.mxu0 0
    %2351 = vmatpush1.bf16.msra.mxu0 %v2243
    %2352 = vmatprep.subr.bf16.mxu0 0
    %2353 = vmatpush1.bf16.msra.mxu0 %v2244
    %2354 = vmatprep.subr.bf16.mxu0 0
    %2355 = vmatpush1.bf16.msra.mxu0 %v2245
    %2356 = vmatprep.subr.bf16.mxu0 0
    %2357 = vmatpush1.bf16.msra.mxu0 %v2246
    %2358 = vmatprep.subr.bf16.mxu0 0
    %2359 = vmatpush1.bf16.msra.mxu0 %v2247
    %2360 = vmatprep.subr.bf16.mxu0 0
    %2361 = vmatpush1.bf16.msra.mxu0 %v2248
    %2362 = vmatprep.subr.bf16.mxu0 0
    %2363 = vmatpush1.bf16.msra.mxu0 %v2249
    %2364 = vmatprep.subr.bf16.mxu0 0
    %2365 = vmatpush1.bf16.msra.mxu0 %v2250
    %2366 = vmatprep.subr.bf16.mxu0 0
    %2367 = vmatpush1.bf16.msra.mxu0 %v2251
    %2368 = vmatprep.subr.bf16.mxu0 0
    %2369 = vmatpush1.bf16.msra.mxu0 %v2252
    %2370 = vmatprep.subr.bf16.mxu0 0
    %2371 = vmatpush1.bf16.msra.mxu0 %v2253
    %2372 = vmatprep.subr.bf16.mxu0 0
    %2373 = vmatpush1.bf16.msra.mxu0 %v2254
    %2374 = vmatprep.subr.bf16.mxu0 0
    %2375 = vmatpush1.bf16.msra.mxu0 %v2255
    %2376 = vmatprep.mubr.bf16.mxu0 %v1975
    %2377 = vmatmul.mubr.bf16.gmra.mrb[0].mxu0 %v1974
    %v2378 = vpop.f32.mrb[0].mxu0
    %v2379 = vadd.f32 %v2339, %v2378
    %v2380 = vpop.f32.mrb[0].mxu0
    %v2381 = vpop.f32.mrb[0].mxu0
    %v2382 = vpop.f32.mrb[0].mxu0
    %2383 = vdwg.mxu0
    %2384 = vmatprep.subr.bf16.mxu0 0
    %2385 = vmatpush1.bf16.msra.mxu0 %v2256
    %2386 = vmatprep.subr.bf16.mxu0 0
    %2387 = vmatpush1.bf16.msra.mxu0 %v2257
    %2388 = vmatprep.subr.bf16.mxu0 0
    %2389 = vmatpush1.bf16.msra.mxu0 %v2258
    %2390 = vmatprep.subr.bf16.mxu0 0
    %2391 = vmatpush1.bf16.msra.mxu0 %v2259
    %2392 = vmatprep.subr.bf16.mxu0 0
    %2393 = vmatpush1.bf16.msra.mxu0 %v2260
    %2394 = vmatprep.subr.bf16.mxu0 0
    %2395 = vmatpush1.bf16.msra.mxu0 %v2261
    %2396 = vmatprep.subr.bf16.mxu0 0
    %2397 = vmatpush1.bf16.msra.mxu0 %v2262
    %2398 = vmatprep.subr.bf16.mxu0 0
    %2399 = vmatpush1.bf16.msra.mxu0 %v2263
    %2400 = vmatprep.subr.bf16.mxu0 0
    %2401 = vmatpush1.bf16.msra.mxu0 0
    %2402 = vmatprep.subr.bf16.mxu0 0
    %2403 = vmatpush1.bf16.msra.mxu0 0
    %2404 = vmatprep.subr.bf16.mxu0 0
    %2405 = vmatpush1.bf16.msra.mxu0 0
    %2406 = vmatprep.subr.bf16.mxu0 0
    %2407 = vmatpush1.bf16.msra.mxu0 0
    %2408 = vmatprep.subr.bf16.mxu0 0
    %2409 = vmatpush1.bf16.msra.mxu0 0
    %2410 = vmatprep.subr.bf16.mxu0 0
    %2411 = vmatpush1.bf16.msra.mxu0 0
    %2412 = vmatprep.subr.bf16.mxu0 0
    %2413 = vmatpush1.bf16.msra.mxu0 0
    %2414 = vmatprep.subr.bf16.mxu0 0
    %2415 = vmatpush1.bf16.msra.mxu0 0
    %2416 = vmatprep.mubr.bf16.mxu0 0
    %2417 = vmatmul.mubr.bf16.gmra.mrb[0].mxu0 %v1976
    %v2418 = vpop.f32.mrb[0].mxu0
    %v2419 = vadd.f32 %v2379, %v2418
    %v2420 = vpop.f32.mrb[0].mxu0
    %v2421 = vpop.f32.mrb[0].mxu0
    %v2422 = vpop.f32.mrb[0].mxu0
    %2423 = vdwg.mxu0
    %2424 = vst [vmem:[#allocation14] sm:$0xff] %v2419
    // Predicated region
    $region62: #{_mlp_pallas.1} parent=1 // pred_check
      _
    $region63: #{_mlp_pallas.1} parent=1 // pred_check_branch
      %2426 = sbr.rel (0) target = $region65
    $region64: #{_mlp_pallas.1} parent=1 // pred_region
      %s2428 = ssub.s32 128, 128
      %2429 = vsyncadd [#allocation4], %s2428
      %s2431 = sshll.u32 [#allocation14], 4
      %s2432 = int_to_ptr.vmem [resolvable:$true] %s2431
      %2434 = dma.vmem_to_hbm [thread:$0]  %s2432, 128, %s8, [#allocation4]
    $region65: #{_mlp_pallas.1} parent=1 // pred_fallthru
      _
    // Predicated region
    $region66: #{_mlp_pallas.1} parent=1 // pred_check
      _
    $region67: #{_mlp_pallas.1} parent=1 // pred_check_branch
      %2436 = sbr.rel (0) target = $region69
    $region68: #{_mlp_pallas.1} parent=1 // pred_region
      %2437 = dma.done [#allocation4], 128
    $region69: #{_mlp_pallas.1} parent=1 // pred_fallthru
      _
    %2438 = vsyncpa [#allocation3], 1
    %2439 = vsyncpa [#allocation6], 1
    %2440 = vsyncpa [#allocation9], 1
    %2441 = vsyncpa [#allocation12], 1
    %2442 = vsyncpa [#allocation4], 1

</llo_original>
